<compile_context>
chip_gen: v7x
topology: tpu7x:2x2x1
jax: 0.10.0
libtpu: 0.0.40
codegen_flags: <defaults>
</compile_context>

<pallas_src>
import functools

import jax
import jax.numpy as jnp
from jax.experimental import pallas as pl
from jax.experimental.pallas import tpu as pltpu


# ----------------------------------------------------------------------------
# In-kernel building blocks (all dense math happens here)
# ----------------------------------------------------------------------------
def _encode(p_ref, wc_ref, bc_ref, wf_ref, bf_ref, *, n, hw):
    """Synthetic backbone: conv(im2col matmul) -> ReLU -> GAP -> Linear.

    p_ref: (n*hw, KH*KW*Cin) bf16 im2col patches for the n samples of this block.
    Returns float32 features of shape (n, F).
    """
    # Conv as a single MXU matmul, f32 accumulation.
    conv = jnp.dot(p_ref[...], wc_ref[...], preferred_element_type=jnp.float32)
    conv = jnp.maximum(conv + bc_ref[...], 0.0)                     # (n*hw, Cc)

    # Global average pooling per sample, expressed as a tiny block-diagonal
    # averaging matmul (avoids sub-tile concats / reshapes in-kernel).
    r = jax.lax.broadcasted_iota(jnp.int32, (n, n * hw), 0)
    c = jax.lax.broadcasted_iota(jnp.int32, (n, n * hw), 1)
    inv = 1.0 / float(hw)
    pool = jnp.where((c >= r * hw) & (c < (r + 1) * hw), inv, 0.0)  # (n, n*hw) f32
    pooled = jnp.dot(pool, conv, preferred_element_type=jnp.float32)  # (n, Cc)

    feat = jnp.dot(pooled.astype(jnp.bfloat16), wf_ref[...],
                   preferred_element_type=jnp.float32) + bf_ref[...]  # (n, F)
    return feat


def _project(feat, w1_ref, b1_ref, g_ref, bt_ref, w2_ref, b2_ref):
    """BYOL head: Linear -> BatchNorm1d (train-mode batch stats) -> ReLU -> Linear."""
    h = jnp.dot(feat.astype(jnp.bfloat16), w1_ref[...],
                preferred_element_type=jnp.float32) + b1_ref[...]     # (n, Hd)
    n = h.shape[0]
    mean = jnp.sum(h, axis=0, keepdims=True) * (1.0 / float(n))
    diff = h - mean
    var = jnp.sum(diff * diff, axis=0, keepdims=True) * (1.0 / float(n))
    hn = diff * jax.lax.rsqrt(var + 1e-5)
    hn = jnp.maximum(hn * g_ref[...] + bt_ref[...], 0.0)              # ReLU
    return jnp.dot(hn.astype(jnp.bfloat16), w2_ref[...],
                   preferred_element_type=jnp.float32) + b2_ref[...]  # (n, P)


# ----------------------------------------------------------------------------
# Kernel 1: fused two-view path. grid=(2,) over views ("parallel").
# Each step: encoder -> online projector -> target projector for one view.
# BN batch stats are computed per view (matches the separate PyTorch calls).
# ----------------------------------------------------------------------------
def byol_two_view_kernel(p_ref, wc_ref, bc_ref, wf_ref, bf_ref,
                         w1o_ref, b1o_ref, go_ref, bo_ref, w2o_ref, b2o_ref,
                         w1t_ref, b1t_ref, gt_ref, btt_ref, w2t_ref, b2t_ref,
                         on_ref, tg_ref, *, n_per_view, hw):
    feat = _encode(p_ref, wc_ref, bc_ref, wf_ref, bf_ref, n=n_per_view, hw=hw)
    on_ref[0] = _project(feat, w1o_ref, b1o_ref, go_ref, bo_ref, w2o_ref, b2o_ref)
    tg_ref[0] = _project(feat, w1t_ref, b1t_ref, gt_ref, btt_ref, w2t_ref, b2t_ref)


# ----------------------------------------------------------------------------
# Kernel 2: fused classifier path. grid=(N,) over samples ("parallel").
# encoder -> Linear -> Sigmoid, lane-dense 128-wide output slab.
# ----------------------------------------------------------------------------
def byol_classifier_kernel(p_ref, wc_ref, bc_ref, wf_ref, bf_ref,
                           wcls_ref, bcls_ref, out_ref, *, hw):
    feat = _encode(p_ref, wc_ref, bc_ref, wf_ref, bf_ref, n=1, hw=hw)
    logits = jnp.dot(feat.astype(jnp.bfloat16), wcls_ref[...],
                     preferred_element_type=jnp.float32) + bcls_ref[...]
    # sigmoid = 1 / (1 + exp(-x)) : exp on EUP, reciprocal instead of VALU divide.
    out_ref[0] = pl.reciprocal(1.0 + jnp.exp(-logits))


# ----------------------------------------------------------------------------
# JAX wrappers (layout glue only: NCHW->NHWC, im2col, pallas_call plumbing)
# ----------------------------------------------------------------------------
def _const_spec(a):
    nd = a.ndim
    return pl.BlockSpec(a.shape, lambda *_i, _nd=nd: (0,) * _nd)


def _im2col(x_nchw, kh_=3, kw_=3):
    """NCHW -> zero-padded im2col patches of shape (B*H*W, KH*KW*Cin), bf16."""
    x = jnp.transpose(x_nchw, (0, 2, 3, 1)).astype(jnp.float32)   # NHWC
    b, h, w, c = x.shape
    xp = jnp.pad(x, ((0, 0), (1, 1), (1, 1), (0, 0)))             # conv padding=1
    cols = [xp[:, i:i + h, j:j + w, :] for i in range(kh_) for j in range(kw_)]
    patches = jnp.concatenate(cols, axis=-1)                      # (B,H,W,KH*KW*C)
    return patches.reshape(b * h * w, kh_ * kw_ * c).astype(jnp.bfloat16), (b, h, w, c)


def two_view_forward(x1, x2, online, target):
    n = x1.shape[0]
    patches, (_, h, w, _) = _im2col(jnp.concatenate([x1, x2], axis=0))
    hw = h * w
    nhw = n * hw
    kdim = patches.shape[1]
    proj_dim = online["w2"].shape[1]

    weights = [online[k] for k in ("wc", "bc", "wf", "bf",
                                   "w1", "b1", "gamma", "beta", "w2", "b2")]
    weights += [target[k] for k in ("w1", "b1", "gamma", "beta", "w2", "b2")]

    in_specs = [pl.BlockSpec((nhw, kdim), lambda i: (i, 0))]
    in_specs += [_const_spec(a) for a in weights]
    out_specs = [pl.BlockSpec((1, n, proj_dim), lambda i: (i, 0, 0))] * 2
    out_shape = [jax.ShapeDtypeStruct((2, n, proj_dim), jnp.float32)] * 2

    kern = functools.partial(byol_two_view_kernel, n_per_view=n, hw=hw)
    on_out, tg_out = pl.pallas_call(
        kern,
        grid=(2,),                      # one grid step per view
        in_specs=in_specs,
        out_specs=out_specs,
        out_shape=out_shape,
        compiler_params=pltpu.CompilerParams(dimension_semantics=("parallel",)),
    )(patches, *weights)
    return on_out[0], on_out[1], tg_out[0], tg_out[1]


def classify_forward(x1, online, num_classes):
    patches, (n, h, w, _) = _im2col(x1)
    hw = h * w
    kdim = patches.shape[1]
    ncls_pad = online["wcls"].shape[1]

    weights = [online[k] for k in ("wc", "bc", "wf", "bf", "wcls", "bcls")]
    in_specs = [pl.BlockSpec((hw, kdim), lambda i: (i, 0))]
    in_specs += [_const_spec(a) for a in weights]

    kern = functools.partial(byol_classifier_kernel, hw=hw)
    out = pl.pallas_call(
        kern,
        grid=(n,),                      # one grid step per sample
        in_specs=in_specs,
        out_specs=pl.BlockSpec((1, 1, ncls_pad), lambda i: (i, 0, 0)),
        out_shape=jax.ShapeDtypeStruct((n, 1, ncls_pad), jnp.float32),
        compiler_params=pltpu.CompilerParams(dimension_semantics=("parallel",)),
    )(patches, *weights)
    return out[:, 0, :num_classes]      # drop lane padding -> (N, num_classes)


def byol_forward(x1, x2, online, target, num_classes=15):
    """Mirrors BYOL.forward(x1, x2)."""
    if x2 is None:
        return classify_forward(x1, online, num_classes)
    # Note: online_encoder and target_encoder share the SAME base_encoder
    # module in the PyTorch code, so the backbone features are shared;
    # .detach() on the target branch is a grad-only concept (forward identical).
    return two_view_forward(x1, x2, online, target)


# ----------------------------------------------------------------------------
# Deterministic parameter construction + smoke test
# ----------------------------------------------------------------------------
if __name__ == "__main__":
    key = jax.random.PRNGKey(0)
    N, Cin, Hs, Ws = 2, 4, 16, 16
    Cconv, feat_dim = 128, 128            # lane-dense conv / backbone widths
    hidden_dim, proj_dim = 256, 128       # scaled-down BYOL head widths
    num_classes, ncls_pad = 15, 128       # classifier computed in a 128-wide slab

    keys = jax.random.split(key, 12)

    def init_w(k, shape, scale):          # matmul weights stored bf16
        return (scale * jax.random.normal(k, shape, jnp.float32)).astype(jnp.bfloat16)

    def init_b(k, shape, scale):          # biases / BN params stay f32
        return scale * jax.random.normal(k, shape, jnp.float32)

    wcls_raw = 0.05 * jax.random.normal(keys[7], (feat_dim, num_classes), jnp.float32)
    bcls_raw = 0.01 * jax.random.normal(keys[8], (1, num_classes), jnp.float32)

    online_params = dict(
        # synthetic backbone (replaces pretrained resnet18)
        wc=init_w(keys[0], (3 * 3 * Cin, Cconv), 0.10),
        bc=jnp.zeros((1, Cconv), jnp.float32),
        wf=init_w(keys[1], (Cconv, feat_dim), 0.10),
        bf=init_b(keys[2], (1, feat_dim), 0.01),
        # online projector head: Linear -> BN -> ReLU -> Linear
        w1=init_w(keys[3], (feat_dim, hidden_dim), 0.05),
        b1=init_b(keys[4], (1, hidden_dim), 0.01),
        gamma=jnp.ones((1, hidden_dim), jnp.float32),
        beta=jnp.zeros((1, hidden_dim), jnp.float32),
        w2=init_w(keys[5], (hidden_dim, proj_dim), 0.05),
        b2=init_b(keys[6], (1, proj_dim), 0.01),
        # classifier, lane-padded to 128 output columns (zeros, sliced in wrapper)
        wcls=jnp.pad(wcls_raw, ((0, 0), (0, ncls_pad - num_classes))).astype(jnp.bfloat16),
        bcls=jnp.pad(bcls_raw, ((0, 0), (0, ncls_pad - num_classes))),
    )
    # Target-encoder head params are copied from the online head at init
    # (param_target.data.copy_(param_online.data)).
    target_params = {k: online_params[k]
                     for k in ("w1", "b1", "gamma", "beta", "w2", "b2")}

    x1 = jax.random.normal(keys[9], (N, Cin, Hs, Ws), jnp.float32)
    x2 = jax.random.normal(keys[10], (N, Cin, Hs, Ws), jnp.float32)

    # BYOL two-view path: (online_proj_one, online_proj_two, target_proj_one, target_proj_two)
    projs = byol_forward(x1, x2, online_params, target_params)
    # Classifier path: forward(x1) -> Sigmoid(Linear(base_encoder(x1)))
    cls_out = byol_forward(x1, None, online_params, target_params, num_classes)

    jax.block_until_ready((projs, cls_out))

    assert all(p.shape == (N, proj_dim) for p in projs)
    assert cls_out.shape == (N, num_classes)
    print("KERNEL_OK")
</pallas_src>

<mosaic_0001>
module attributes {stable_mosaic.version = 11 : i64} {
  func.func @byol_two_view_kernel(%arg0: i32, %arg1: memref<512x36xbf16, #tpu.memory_space<vmem>>, %arg2: memref<36x128xbf16, #tpu.memory_space<vmem>>, %arg3: memref<1x128xf32, #tpu.memory_space<vmem>>, %arg4: memref<128x128xbf16, #tpu.memory_space<vmem>>, %arg5: memref<1x128xf32, #tpu.memory_space<vmem>>, %arg6: memref<128x256xbf16, #tpu.memory_space<vmem>>, %arg7: memref<1x256xf32, #tpu.memory_space<vmem>>, %arg8: memref<1x256xf32, #tpu.memory_space<vmem>>, %arg9: memref<1x256xf32, #tpu.memory_space<vmem>>, %arg10: memref<256x128xbf16, #tpu.memory_space<vmem>>, %arg11: memref<1x128xf32, #tpu.memory_space<vmem>>, %arg12: memref<128x256xbf16, #tpu.memory_space<vmem>>, %arg13: memref<1x256xf32, #tpu.memory_space<vmem>>, %arg14: memref<1x256xf32, #tpu.memory_space<vmem>>, %arg15: memref<1x256xf32, #tpu.memory_space<vmem>>, %arg16: memref<256x128xbf16, #tpu.memory_space<vmem>>, %arg17: memref<1x128xf32, #tpu.memory_space<vmem>>, %arg18: memref<1x2x128xf32, #tpu.memory_space<vmem>>, %arg19: memref<1x2x128xf32, #tpu.memory_space<vmem>>) attributes {dimension_semantics = [#tpu.dimension_semantics<parallel>], iteration_bounds = array<i64: 2>, scalar_prefetch = 0 : i64, scratch_operands = 0 : i64, tpu.core_type = #tpu.core_type<tc>, window_params = [{transform_indices = @transform_0, window_bounds = array<i64: 512, 36>}, {pipeline_mode = #tpu.pipeline_mode<synchronous>, transform_indices = @transform_1, window_bounds = array<i64: 36, 128>}, {pipeline_mode = #tpu.pipeline_mode<synchronous>, transform_indices = @transform_2, window_bounds = array<i64: 1, 128>}, {pipeline_mode = #tpu.pipeline_mode<synchronous>, transform_indices = @transform_3, window_bounds = array<i64: 128, 128>}, {pipeline_mode = #tpu.pipeline_mode<synchronous>, transform_indices = @transform_4, window_bounds = array<i64: 1, 128>}, {pipeline_mode = #tpu.pipeline_mode<synchronous>, transform_indices = @transform_5, window_bounds = array<i64: 128, 256>}, {pipeline_mode = #tpu.pipeline_mode<synchronous>, transform_indices = @transform_6, window_bounds = array<i64: 1, 256>}, {pipeline_mode = #tpu.pipeline_mode<synchronous>, transform_indices = @transform_7, window_bounds = array<i64: 1, 256>}, {pipeline_mode = #tpu.pipeline_mode<synchronous>, transform_indices = @transform_8, window_bounds = array<i64: 1, 256>}, {pipeline_mode = #tpu.pipeline_mode<synchronous>, transform_indices = @transform_9, window_bounds = array<i64: 256, 128>}, {pipeline_mode = #tpu.pipeline_mode<synchronous>, transform_indices = @transform_10, window_bounds = array<i64: 1, 128>}, {pipeline_mode = #tpu.pipeline_mode<synchronous>, transform_indices = @transform_11, window_bounds = array<i64: 128, 256>}, {pipeline_mode = #tpu.pipeline_mode<synchronous>, transform_indices = @transform_12, window_bounds = array<i64: 1, 256>}, {pipeline_mode = #tpu.pipeline_mode<synchronous>, transform_indices = @transform_13, window_bounds = array<i64: 1, 256>}, {pipeline_mode = #tpu.pipeline_mode<synchronous>, transform_indices = @transform_14, window_bounds = array<i64: 1, 256>}, {pipeline_mode = #tpu.pipeline_mode<synchronous>, transform_indices = @transform_15, window_bounds = array<i64: 256, 128>}, {pipeline_mode = #tpu.pipeline_mode<synchronous>, transform_indices = @transform_16, window_bounds = array<i64: 1, 128>}, {transform_indices = @transform_17, window_bounds = array<i64: 1, 2, 128>}, {transform_indices = @transform_18, window_bounds = array<i64: 1, 2, 128>}]} {
    %c0 = arith.constant 0 : index
    %c0_0 = arith.constant 0 : index
    %0 = vector.load %arg1[%c0, %c0_0] : memref<512x36xbf16, #tpu.memory_space<vmem>>, vector<512x36xbf16>
    %c0_1 = arith.constant 0 : index
    %c0_2 = arith.constant 0 : index
    %1 = vector.load %arg2[%c0_1, %c0_2] : memref<36x128xbf16, #tpu.memory_space<vmem>>, vector<36x128xbf16>
    %cst = arith.constant dense<0.000000e+00> : vector<512x128xf32>
    %2 = tpu.matmul %0, %1, %cst {dimension_numbers = #tpu.dot_dimension_numbers<[1], [0], [0], [1], [0, 0, 1, 1], [], []>} : vector<512x36xbf16>, vector<36x128xbf16>, vector<512x128xf32> -> vector<512x128xf32>
    %c0_3 = arith.constant 0 : index
    %c0_4 = arith.constant 0 : index
    %3 = vector.load %arg3[%c0_3, %c0_4] : memref<1x128xf32, #tpu.memory_space<vmem>>, vector<1x128xf32>
    %4 = vector.broadcast %3 : vector<1x128xf32> to vector<512x128xf32>
    %5 = arith.addf %2, %4 : vector<512x128xf32>
    %cst_5 = arith.constant 0.000000e+00 : f32
    %6 = vector.broadcast %cst_5 : f32 to vector<512x128xf32>
    %7 = arith.maximumf %5, %6 : vector<512x128xf32>
    %8 = tpu.iota {dimensions = array<i32: 0>} : vector<2x512xi32>
    %9 = tpu.iota {dimensions = array<i32: 1>} : vector<2x512xi32>
    %c256_i32 = arith.constant 256 : i32
    %10 = vector.broadcast %c256_i32 : i32 to vector<2x512xi32>
    %11 = arith.muli %8, %10 : vector<2x512xi32>
    %12 = arith.cmpi sge, %9, %11 : vector<2x512xi32>
    %c1_i32 = arith.constant 1 : i32
    %13 = vector.broadcast %c1_i32 : i32 to vector<2x512xi32>
    %14 = arith.addi %8, %13 : vector<2x512xi32>
    %c256_i32_6 = arith.constant 256 : i32
    %15 = vector.broadcast %c256_i32_6 : i32 to vector<2x512xi32>
    %16 = arith.muli %14, %15 : vector<2x512xi32>
    %17 = arith.cmpi slt, %9, %16 : vector<2x512xi32>
    %18 = arith.andi %12, %17 : vector<2x512xi1>
    %cst_7 = arith.constant 3.906250e-03 : f32
    %cst_8 = arith.constant 0.000000e+00 : f32
    %19 = vector.broadcast %cst_7 : f32 to vector<2x512xf32>
    %20 = vector.broadcast %cst_8 : f32 to vector<2x512xf32>
    %21 = arith.select %18, %19, %20 : vector<2x512xi1>, vector<2x512xf32>
    %cst_9 = arith.constant dense<0.000000e+00> : vector<2x128xf32>
    %22 = tpu.matmul %21, %7, %cst_9 {dimension_numbers = #tpu.dot_dimension_numbers<[1], [0], [0], [1], [0, 0, 1, 1], [], []>} : vector<2x512xf32>, vector<512x128xf32>, vector<2x128xf32> -> vector<2x128xf32>
    %23 = arith.truncf %22 : vector<2x128xf32> to vector<2x128xbf16>
    %c0_10 = arith.constant 0 : index
    %c0_11 = arith.constant 0 : index
    %24 = vector.load %arg4[%c0_10, %c0_11] : memref<128x128xbf16, #tpu.memory_space<vmem>>, vector<128x128xbf16>
    %cst_12 = arith.constant dense<0.000000e+00> : vector<2x128xf32>
    %25 = tpu.matmul %23, %24, %cst_12 {dimension_numbers = #tpu.dot_dimension_numbers<[1], [0], [0], [1], [0, 0, 1, 1], [], []>} : vector<2x128xbf16>, vector<128x128xbf16>, vector<2x128xf32> -> vector<2x128xf32>
    %c0_13 = arith.constant 0 : index
    %c0_14 = arith.constant 0 : index
    %26 = vector.load %arg5[%c0_13, %c0_14] : memref<1x128xf32, #tpu.memory_space<vmem>>, vector<1x128xf32>
    %27 = vector.broadcast %26 : vector<1x128xf32> to vector<2x128xf32>
    %28 = arith.addf %25, %27 : vector<2x128xf32>
    %29 = arith.truncf %28 : vector<2x128xf32> to vector<2x128xbf16>
    %c0_15 = arith.constant 0 : index
    %c0_16 = arith.constant 0 : index
    %30 = vector.load %arg6[%c0_15, %c0_16] : memref<128x256xbf16, #tpu.memory_space<vmem>>, vector<128x256xbf16>
    %cst_17 = arith.constant dense<0.000000e+00> : vector<2x256xf32>
    %31 = tpu.matmul %29, %30, %cst_17 {dimension_numbers = #tpu.dot_dimension_numbers<[1], [0], [0], [1], [0, 0, 1, 1], [], []>} : vector<2x128xbf16>, vector<128x256xbf16>, vector<2x256xf32> -> vector<2x256xf32>
    %c0_18 = arith.constant 0 : index
    %c0_19 = arith.constant 0 : index
    %32 = vector.load %arg7[%c0_18, %c0_19] : memref<1x256xf32, #tpu.memory_space<vmem>>, vector<1x256xf32>
    %33 = vector.broadcast %32 : vector<1x256xf32> to vector<2x256xf32>
    %34 = arith.addf %31, %33 : vector<2x256xf32>
    %cst_20 = arith.constant dense<0.000000e+00> : vector<256xf32>
    %35 = vector.multi_reduction <add>, %34, %cst_20 [0] : vector<2x256xf32> to vector<256xf32>
    %36 = vector.shape_cast %35 : vector<256xf32> to vector<1x256xf32>
    %cst_21 = arith.constant 5.000000e-01 : f32
    %37 = vector.broadcast %cst_21 : f32 to vector<1x256xf32>
    %38 = arith.mulf %36, %37 : vector<1x256xf32>
    %39 = vector.broadcast %38 : vector<1x256xf32> to vector<2x256xf32>
    %40 = arith.subf %34, %39 : vector<2x256xf32>
    %41 = arith.mulf %40, %40 : vector<2x256xf32>
    %cst_22 = arith.constant dense<0.000000e+00> : vector<256xf32>
    %42 = vector.multi_reduction <add>, %41, %cst_22 [0] : vector<2x256xf32> to vector<256xf32>
    %43 = vector.shape_cast %42 : vector<256xf32> to vector<1x256xf32>
    %cst_23 = arith.constant 5.000000e-01 : f32
    %44 = vector.broadcast %cst_23 : f32 to vector<1x256xf32>
    %45 = arith.mulf %43, %44 : vector<1x256xf32>
    %cst_24 = arith.constant 9.99999974E-6 : f32
    %46 = vector.broadcast %cst_24 : f32 to vector<1x256xf32>
    %47 = arith.addf %45, %46 : vector<1x256xf32>
    %48 = math.rsqrt %47 : vector<1x256xf32>
    %49 = vector.broadcast %48 : vector<1x256xf32> to vector<2x256xf32>
    %50 = arith.mulf %40, %49 : vector<2x256xf32>
    %c0_25 = arith.constant 0 : index
    %c0_26 = arith.constant 0 : index
    %51 = vector.load %arg8[%c0_25, %c0_26] : memref<1x256xf32, #tpu.memory_space<vmem>>, vector<1x256xf32>
    %52 = vector.broadcast %51 : vector<1x256xf32> to vector<2x256xf32>
    %53 = arith.mulf %50, %52 : vector<2x256xf32>
    %c0_27 = arith.constant 0 : index
    %c0_28 = arith.constant 0 : index
    %54 = vector.load %arg9[%c0_27, %c0_28] : memref<1x256xf32, #tpu.memory_space<vmem>>, vector<1x256xf32>
    %55 = vector.broadcast %54 : vector<1x256xf32> to vector<2x256xf32>
    %56 = arith.addf %53, %55 : vector<2x256xf32>
    %cst_29 = arith.constant 0.000000e+00 : f32
    %57 = vector.broadcast %cst_29 : f32 to vector<2x256xf32>
    %58 = arith.maximumf %56, %57 : vector<2x256xf32>
    %59 = arith.truncf %58 : vector<2x256xf32> to vector<2x256xbf16>
    %c0_30 = arith.constant 0 : index
    %c0_31 = arith.constant 0 : index
    %60 = vector.load %arg10[%c0_30, %c0_31] : memref<256x128xbf16, #tpu.memory_space<vmem>>, vector<256x128xbf16>
    %cst_32 = arith.constant dense<0.000000e+00> : vector<2x128xf32>
    %61 = tpu.matmul %59, %60, %cst_32 {dimension_numbers = #tpu.dot_dimension_numbers<[1], [0], [0], [1], [0, 0, 1, 1], [], []>} : vector<2x256xbf16>, vector<256x128xbf16>, vector<2x128xf32> -> vector<2x128xf32>
    %c0_33 = arith.constant 0 : index
    %c0_34 = arith.constant 0 : index
    %62 = vector.load %arg11[%c0_33, %c0_34] : memref<1x128xf32, #tpu.memory_space<vmem>>, vector<1x128xf32>
    %63 = vector.broadcast %62 : vector<1x128xf32> to vector<2x128xf32>
    %64 = arith.addf %61, %63 : vector<2x128xf32>
    %c0_35 = arith.constant 0 : index
    %c0_36 = arith.constant 0 : index
    %c0_37 = arith.constant 0 : index
    %65 = vector.load %arg18[%c0_35, %c0_36, %c0_37] : memref<1x2x128xf32, #tpu.memory_space<vmem>>, vector<1x2x128xf32>
    %66 = vector.shape_cast %65 : vector<1x2x128xf32> to vector<2x128xf32>
    %67 = vector.shape_cast %64 : vector<2x128xf32> to vector<1x2x128xf32>
    tpu.vector_store %arg18[%c0_35, %c0_36, %c0_37], %67 {strides = array<i32>} : memref<1x2x128xf32, #tpu.memory_space<vmem>>, vector<1x2x128xf32>,
    %68 = arith.truncf %28 : vector<2x128xf32> to vector<2x128xbf16>
    %c0_38 = arith.constant 0 : index
    %c0_39 = arith.constant 0 : index
    %69 = vector.load %arg12[%c0_38, %c0_39] : memref<128x256xbf16, #tpu.memory_space<vmem>>, vector<128x256xbf16>
    %cst_40 = arith.constant dense<0.000000e+00> : vector<2x256xf32>
    %70 = tpu.matmul %68, %69, %cst_40 {dimension_numbers = #tpu.dot_dimension_numbers<[1], [0], [0], [1], [0, 0, 1, 1], [], []>} : vector<2x128xbf16>, vector<128x256xbf16>, vector<2x256xf32> -> vector<2x256xf32>
    %c0_41 = arith.constant 0 : index
    %c0_42 = arith.constant 0 : index
    %71 = vector.load %arg13[%c0_41, %c0_42] : memref<1x256xf32, #tpu.memory_space<vmem>>, vector<1x256xf32>
    %72 = vector.broadcast %71 : vector<1x256xf32> to vector<2x256xf32>
    %73 = arith.addf %70, %72 : vector<2x256xf32>
    %cst_43 = arith.constant dense<0.000000e+00> : vector<256xf32>
    %74 = vector.multi_reduction <add>, %73, %cst_43 [0] : vector<2x256xf32> to vector<256xf32>
    %75 = vector.shape_cast %74 : vector<256xf32> to vector<1x256xf32>
    %cst_44 = arith.constant 5.000000e-01 : f32
    %76 = vector.broadcast %cst_44 : f32 to vector<1x256xf32>
    %77 = arith.mulf %75, %76 : vector<1x256xf32>
    %78 = vector.broadcast %77 : vector<1x256xf32> to vector<2x256xf32>
    %79 = arith.subf %73, %78 : vector<2x256xf32>
    %80 = arith.mulf %79, %79 : vector<2x256xf32>
    %cst_45 = arith.constant dense<0.000000e+00> : vector<256xf32>
    %81 = vector.multi_reduction <add>, %80, %cst_45 [0] : vector<2x256xf32> to vector<256xf32>
    %82 = vector.shape_cast %81 : vector<256xf32> to vector<1x256xf32>
    %cst_46 = arith.constant 5.000000e-01 : f32
    %83 = vector.broadcast %cst_46 : f32 to vector<1x256xf32>
    %84 = arith.mulf %82, %83 : vector<1x256xf32>
    %cst_47 = arith.constant 9.99999974E-6 : f32
    %85 = vector.broadcast %cst_47 : f32 to vector<1x256xf32>
    %86 = arith.addf %84, %85 : vector<1x256xf32>
    %87 = math.rsqrt %86 : vector<1x256xf32>
    %88 = vector.broadcast %87 : vector<1x256xf32> to vector<2x256xf32>
    %89 = arith.mulf %79, %88 : vector<2x256xf32>
    %c0_48 = arith.constant 0 : index
    %c0_49 = arith.constant 0 : index
    %90 = vector.load %arg14[%c0_48, %c0_49] : memref<1x256xf32, #tpu.memory_space<vmem>>, vector<1x256xf32>
    %91 = vector.broadcast %90 : vector<1x256xf32> to vector<2x256xf32>
    %92 = arith.mulf %89, %91 : vector<2x256xf32>
    %c0_50 = arith.constant 0 : index
    %c0_51 = arith.constant 0 : index
    %93 = vector.load %arg15[%c0_50, %c0_51] : memref<1x256xf32, #tpu.memory_space<vmem>>, vector<1x256xf32>
    %94 = vector.broadcast %93 : vector<1x256xf32> to vector<2x256xf32>
    %95 = arith.addf %92, %94 : vector<2x256xf32>
    %cst_52 = arith.constant 0.000000e+00 : f32
    %96 = vector.broadcast %cst_52 : f32 to vector<2x256xf32>
    %97 = arith.maximumf %95, %96 : vector<2x256xf32>
    %98 = arith.truncf %97 : vector<2x256xf32> to vector<2x256xbf16>
    %c0_53 = arith.constant 0 : index
    %c0_54 = arith.constant 0 : index
    %99 = vector.load %arg16[%c0_53, %c0_54] : memref<256x128xbf16, #tpu.memory_space<vmem>>, vector<256x128xbf16>
    %cst_55 = arith.constant dense<0.000000e+00> : vector<2x128xf32>
    %100 = tpu.matmul %98, %99, %cst_55 {dimension_numbers = #tpu.dot_dimension_numbers<[1], [0], [0], [1], [0, 0, 1, 1], [], []>} : vector<2x256xbf16>, vector<256x128xbf16>, vector<2x128xf32> -> vector<2x128xf32>
    %c0_56 = arith.constant 0 : index
    %c0_57 = arith.constant 0 : index
    %101 = vector.load %arg17[%c0_56, %c0_57] : memref<1x128xf32, #tpu.memory_space<vmem>>, vector<1x128xf32>
    %102 = vector.broadcast %101 : vector<1x128xf32> to vector<2x128xf32>
    %103 = arith.addf %100, %102 : vector<2x128xf32>
    %c0_58 = arith.constant 0 : index
    %c0_59 = arith.constant 0 : index
    %c0_60 = arith.constant 0 : index
    %104 = vector.load %arg19[%c0_58, %c0_59, %c0_60] : memref<1x2x128xf32, #tpu.memory_space<vmem>>, vector<1x2x128xf32>
    %105 = vector.shape_cast %104 : vector<1x2x128xf32> to vector<2x128xf32>
    %106 = vector.shape_cast %103 : vector<2x128xf32> to vector<1x2x128xf32>
    tpu.vector_store %arg19[%c0_58, %c0_59, %c0_60], %106 {strides = array<i32>} : memref<1x2x128xf32, #tpu.memory_space<vmem>>, vector<1x2x128xf32>,
    return
  }
  func.func @transform_0(%arg0: i32) -> (i32, i32) {
    %c0_i32 = arith.constant 0 : i32
    %c0_i32_0 = arith.constant 0 : i32
    return %arg0, %c0_i32 : i32, i32
  }
  func.func @transform_1(%arg0: i32) -> (i32, i32) {
    %c0_i32 = arith.constant 0 : i32
    %c0_i32_0 = arith.constant 0 : i32
    %c0_i32_1 = arith.constant 0 : i32
    return %c0_i32, %c0_i32_0 : i32, i32
  }
  func.func @transform_2(%arg0: i32) -> (i32, i32) {
    %c0_i32 = arith.constant 0 : i32
    %c0_i32_0 = arith.constant 0 : i32
    %c0_i32_1 = arith.constant 0 : i32
    return %c0_i32, %c0_i32_0 : i32, i32
  }
  func.func @transform_3(%arg0: i32) -> (i32, i32) {
    %c0_i32 = arith.constant 0 : i32
    %c0_i32_0 = arith.constant 0 : i32
    %c0_i32_1 = arith.constant 0 : i32
    return %c0_i32, %c0_i32_0 : i32, i32
  }
  func.func @transform_4(%arg0: i32) -> (i32, i32) {
    %c0_i32 = arith.constant 0 : i32
    %c0_i32_0 = arith.constant 0 : i32
    %c0_i32_1 = arith.constant 0 : i32
    return %c0_i32, %c0_i32_0 : i32, i32
  }
  func.func @transform_5(%arg0: i32) -> (i32, i32) {
    %c0_i32 = arith.constant 0 : i32
    %c0_i32_0 = arith.constant 0 : i32
    %c0_i32_1 = arith.constant 0 : i32
    return %c0_i32, %c0_i32_0 : i32, i32
  }
  func.func @transform_6(%arg0: i32) -> (i32, i32) {
    %c0_i32 = arith.constant 0 : i32
    %c0_i32_0 = arith.constant 0 : i32
    %c0_i32_1 = arith.constant 0 : i32
    return %c0_i32, %c0_i32_0 : i32, i32
  }
  func.func @transform_7(%arg0: i32) -> (i32, i32) {
    %c0_i32 = arith.constant 0 : i32
    %c0_i32_0 = arith.constant 0 : i32
    %c0_i32_1 = arith.constant 0 : i32
    return %c0_i32, %c0_i32_0 : i32, i32
  }
  func.func @transform_8(%arg0: i32) -> (i32, i32) {
    %c0_i32 = arith.constant 0 : i32
    %c0_i32_0 = arith.constant 0 : i32
    %c0_i32_1 = arith.constant 0 : i32
    return %c0_i32, %c0_i32_0 : i32, i32
  }
  func.func @transform_9(%arg0: i32) -> (i32, i32) {
    %c0_i32 = arith.constant 0 : i32
    %c0_i32_0 = arith.constant 0 : i32
    %c0_i32_1 = arith.constant 0 : i32
    return %c0_i32, %c0_i32_0 : i32, i32
  }
  func.func @transform_10(%arg0: i32) -> (i32, i32) {
    %c0_i32 = arith.constant 0 : i32
    %c0_i32_0 = arith.constant 0 : i32
    %c0_i32_1 = arith.constant 0 : i32
    return %c0_i32, %c0_i32_0 : i32, i32
  }
  func.func @transform_11(%arg0: i32) -> (i32, i32) {
    %c0_i32 = arith.constant 0 : i32
    %c0_i32_0 = arith.constant 0 : i32
    %c0_i32_1 = arith.constant 0 : i32
    return %c0_i32, %c0_i32_0 : i32, i32
  }
  func.func @transform_12(%arg0: i32) -> (i32, i32) {
    %c0_i32 = arith.constant 0 : i32
    %c0_i32_0 = arith.constant 0 : i32
    %c0_i32_1 = arith.constant 0 : i32
    return %c0_i32, %c0_i32_0 : i32, i32
  }
  func.func @transform_13(%arg0: i32) -> (i32, i32) {
    %c0_i32 = arith.constant 0 : i32
    %c0_i32_0 = arith.constant 0 : i32
    %c0_i32_1 = arith.constant 0 : i32
    return %c0_i32, %c0_i32_0 : i32, i32
  }
  func.func @transform_14(%arg0: i32) -> (i32, i32) {
    %c0_i32 = arith.constant 0 : i32
    %c0_i32_0 = arith.constant 0 : i32
    %c0_i32_1 = arith.constant 0 : i32
    return %c0_i32, %c0_i32_0 : i32, i32
  }
  func.func @transform_15(%arg0: i32) -> (i32, i32) {
    %c0_i32 = arith.constant 0 : i32
    %c0_i32_0 = arith.constant 0 : i32
    %c0_i32_1 = arith.constant 0 : i32
    return %c0_i32, %c0_i32_0 : i32, i32
  }
  func.func @transform_16(%arg0: i32) -> (i32, i32) {
    %c0_i32 = arith.constant 0 : i32
    %c0_i32_0 = arith.constant 0 : i32
    %c0_i32_1 = arith.constant 0 : i32
    return %c0_i32, %c0_i32_0 : i32, i32
  }
  func.func @transform_17(%arg0: i32) -> (i32, i32, i32) {
    %c0_i32 = arith.constant 0 : i32
    %c0_i32_0 = arith.constant 0 : i32
    %c0_i32_1 = arith.constant 0 : i32
    return %arg0, %c0_i32, %c0_i32_0 : i32, i32, i32
  }
  func.func @transform_18(%arg0: i32) -> (i32, i32, i32) {
    %c0_i32 = arith.constant 0 : i32
    %c0_i32_0 = arith.constant 0 : i32
    %c0_i32_1 = arith.constant 0 : i32
    return %arg0, %c0_i32, %c0_i32_0 : i32, i32, i32
  }
}

</mosaic_0001>

<llo_original>
// kernel: tpu_custom_call.1
$region0: #{tpu_custom_call.1}
  #allocation0 [shape = 'u32[]', space=smem, size = 0x4, offset = 0x4, fixed_abs, tag = 'smem constant byte address 0x4 - core index']
  #allocation1 [shape = 'u32[144,128]{1,0:T(1,128)}', space=vmem, size = 0x12000, scoped, tag = 'internal scratch']
  %s0 = inlined_call_operand.vmem [shape: bf16[1024,36], index: 0, kind: input, shape index: {}]
  %s1 = inlined_call_operand.vmem [shape: bf16[36,128], index: 1, kind: input, shape index: {}]
  %s2 = inlined_call_operand.vmem [shape: f32[1,128], index: 2, kind: input, shape index: {}]
  %s3 = inlined_call_operand.vmem [shape: bf16[128,128], index: 3, kind: input, shape index: {}]
  %s4 = inlined_call_operand.vmem [shape: f32[1,128], index: 4, kind: input, shape index: {}]
  %s5 = inlined_call_operand.vmem [shape: bf16[128,256], index: 5, kind: input, shape index: {}]
  %s6 = inlined_call_operand.vmem [shape: f32[1,256], index: 6, kind: input, shape index: {}]
  %s7 = inlined_call_operand.vmem [shape: f32[1,256], index: 7, kind: input, shape index: {}]
  %s8 = inlined_call_operand.vmem [shape: f32[1,256], index: 8, kind: input, shape index: {}]
  %s9 = inlined_call_operand.vmem [shape: bf16[256,128], index: 9, kind: input, shape index: {}]
  %s10 = inlined_call_operand.vmem [shape: f32[1,128], index: 10, kind: input, shape index: {}]
  %s11 = inlined_call_operand.vmem [shape: bf16[128,256], index: 11, kind: input, shape index: {}]
  %s12 = inlined_call_operand.vmem [shape: f32[1,256], index: 12, kind: input, shape index: {}]
  %s13 = inlined_call_operand.vmem [shape: f32[1,256], index: 13, kind: input, shape index: {}]
  %s14 = inlined_call_operand.vmem [shape: f32[1,256], index: 14, kind: input, shape index: {}]
  %s15 = inlined_call_operand.vmem [shape: bf16[256,128], index: 15, kind: input, shape index: {}]
  %s16 = inlined_call_operand.vmem [shape: f32[1,128], index: 16, kind: input, shape index: {}]
  %s17 = inlined_call_operand.hbm [shape: f32[2,2,128], index: 17, kind: output, shape index: {0}]
  %s18 = inlined_call_operand.hbm [shape: f32[2,2,128], index: 18, kind: output, shape index: {1}]
  %19 = xla_tuple %s17, %s18
  %s20 = sld [smem:[#allocation0]]
  $region109: #{tpu_custom_call.1} parent=0
    _
  %s22 = ssub.s32 1, %s20
  %s23 = scalar_select 0, %s22, %s20
  $region1: #{tpu_custom_call.1} parent=0
    #allocation2 [shape = 'u8[2048]{0}', space=vmem, size = 0x800, scoped, tag = 'output window, operand 0']
    #allocation3 [shape = 's32[2]{0}', space=sflag, size = 0x8, scoped, tag = 'scoped memory for tpu_custom_call.1']
    #allocation4 [shape = 'u8[2048]{0}', space=vmem, size = 0x800, scoped, tag = 'output window, operand 1']
    #allocation5 [shape = 's32[2]{0}', space=sflag, size = 0x8, scoped, tag = 'scoped memory for tpu_custom_call.1']
    %24 = vsyncpa [#allocation3], 0
    %s25 = scalar_lea.sflag [#allocation3], 1
    %26 = vsyncpa %s25, 0
    %27 = vsyncpa [#allocation5], 0
    %s28 = scalar_lea.sflag [#allocation5], 1
    %29 = vsyncpa %s28, 0
    loop: start=0, step=1, limit=4
    $region2: #{tpu_custom_call.1} parent=1 // loop_pre_header
      _
    $region3: #{tpu_custom_call.1} parent=1 // loop_header
      %s31 = sphi 0, %s35
      %p32 = scmp.ge.s32.totalorder %s31, 4
      %s41 = sphi 0, %s43
      %s44 = sphi 0, %s41
      %s45 = sphi 0, %s44
      %s61 = sphi 0, %s45
      %s65 = sphi 0, %s65
      %s67 = sphi 0, %s65
      %s68 = sphi 0, %s67
      %s82 = sphi 0, %s68
      %s86 = sphi 0, %s86
      %s88 = sphi 0, %s86
      %s89 = sphi 0, %s88
      %s103 = sphi 0, %s89
      %s107 = sphi 0, %s107
      %s109 = sphi 0, %s107
      %s110 = sphi 0, %s109
      %s124 = sphi 0, %s110
      %s128 = sphi 0, %s128
      %s130 = sphi 0, %s128
      %s131 = sphi 0, %s130
      %s145 = sphi 0, %s131
      %s149 = sphi 0, %s149
      %s151 = sphi 0, %s149
      %s152 = sphi 0, %s151
      %s166 = sphi 0, %s152
      %s170 = sphi 0, %s170
      %s172 = sphi 0, %s170
      %s173 = sphi 0, %s172
      %s187 = sphi 0, %s173
      %s191 = sphi 0, %s191
      %s193 = sphi 0, %s191
      %s194 = sphi 0, %s193
      %s208 = sphi 0, %s194
      %s212 = sphi 0, %s212
      %s214 = sphi 0, %s212
      %s215 = sphi 0, %s214
      %s229 = sphi 0, %s215
      %s233 = sphi 0, %s233
      %s235 = sphi 0, %s233
      %s236 = sphi 0, %s235
      %s250 = sphi 0, %s236
      %s254 = sphi 0, %s254
      %s256 = sphi 0, %s254
      %s257 = sphi 0, %s256
      %s271 = sphi 0, %s257
      %s275 = sphi 0, %s275
      %s277 = sphi 0, %s275
      %s278 = sphi 0, %s277
      %s292 = sphi 0, %s278
      %s296 = sphi 0, %s296
      %s298 = sphi 0, %s296
      %s299 = sphi 0, %s298
      %s313 = sphi 0, %s299
      %s317 = sphi 0, %s317
      %s319 = sphi 0, %s317
      %s320 = sphi 0, %s319
      %s334 = sphi 0, %s320
      %s338 = sphi 0, %s338
      %s340 = sphi 0, %s338
      %s341 = sphi 0, %s340
      %s355 = sphi 0, %s341
      %s359 = sphi 0, %s359
      %s361 = sphi 0, %s359
      %s362 = sphi 0, %s361
      %s376 = sphi 0, %s362
      %s380 = sphi 0, %s380
      %s382 = sphi 0, %s380
      %s383 = sphi 0, %s382
      %s397 = sphi 0, %s383
      %s403 = sphi 0, %s405
      %s406 = sphi 0, %s403
      %s407 = sphi 0, %s406
      %s423 = sphi 0, %s407
      %s429 = sphi 0, %s431
      %s432 = sphi 0, %s429
      %s433 = sphi 0, %s432
      %s449 = sphi 0, %s433
    $region4: #{tpu_custom_call.1} parent=1 // loop_header_branch
      %34 = sbr.rel (%p32) target = $region8
    $region5: #{tpu_custom_call.1} parent=1 // loop_body
      %s36 = ssub.s32 %s31, 1
      %s37 = ssub.s32 %s31, 2
      %s38 = sadd.s32 %s31, 1
      %s39 = ssub.s32 %s31, %s38
      %p40 = scmp.eq.s32.totalorder %s39, 0
      %s42 = sadd.s32 %s41, 1
      %s43 = scalar_select %p40, %s41, %s42
      %p46 = pneg %p40
      %p47 = scmp.eq.s32.totalorder %s31, 1
      %p48 = por %p46, %p47
      %p49 = scmp.ne.s32.totalorder %s41, %s44
      %p50 = scmp.eq.s32.totalorder %s31, 0
      %p51 = por %p49, %p50
      %p52 = scmp.ne.s32.totalorder %s41, %s44
      %p53 = scmp.eq.s32.totalorder %s36, 1
      %p54 = por %p52, %p53
      %p55 = scmp.ne.s32.totalorder %s44, %s45
      %p56 = scmp.eq.s32.totalorder %s36, 0
      %p57 = por %p55, %p56
      %p58 = scmp.ne.s32.totalorder %s44, %s45
      %p59 = scmp.eq.s32.totalorder %s37, 1
      %p60 = por %p58, %p59
      %p62 = scmp.ne.s32.totalorder %s45, %s61
      %p63 = scmp.eq.s32.totalorder %s37, 0
      %p64 = por %p62, %p63
      %s66 = sadd.s32 %s65, 1
      %p69 = scmp.eq.s32.totalorder %s31, 1
      %p70 = scmp.ne.s32.totalorder %s65, %s67
      %p71 = scmp.eq.s32.totalorder %s31, 0
      %p72 = por %p70, %p71
      %p73 = scmp.ne.s32.totalorder %s65, %s67
      %p74 = scmp.eq.s32.totalorder %s36, 1
      %p75 = por %p73, %p74
      %p76 = scmp.ne.s32.totalorder %s67, %s68
      %p77 = scmp.eq.s32.totalorder %s36, 0
      %p78 = por %p76, %p77
      %p79 = scmp.ne.s32.totalorder %s67, %s68
      %p80 = scmp.eq.s32.totalorder %s37, 1
      %p81 = por %p79, %p80
      %p83 = scmp.ne.s32.totalorder %s68, %s82
      %p84 = scmp.eq.s32.totalorder %s37, 0
      %p85 = por %p83, %p84
      %s87 = sadd.s32 %s86, 1
      %p90 = scmp.eq.s32.totalorder %s31, 1
      %p91 = scmp.ne.s32.totalorder %s86, %s88
      %p92 = scmp.eq.s32.totalorder %s31, 0
      %p93 = por %p91, %p92
      %p94 = scmp.ne.s32.totalorder %s86, %s88
      %p95 = scmp.eq.s32.totalorder %s36, 1
      %p96 = por %p94, %p95
      %p97 = scmp.ne.s32.totalorder %s88, %s89
      %p98 = scmp.eq.s32.totalorder %s36, 0
      %p99 = por %p97, %p98
      %p100 = scmp.ne.s32.totalorder %s88, %s89
      %p101 = scmp.eq.s32.totalorder %s37, 1
      %p102 = por %p100, %p101
      %p104 = scmp.ne.s32.totalorder %s89, %s103
      %p105 = scmp.eq.s32.totalorder %s37, 0
      %p106 = por %p104, %p105
      %s108 = sadd.s32 %s107, 1
      %p111 = scmp.eq.s32.totalorder %s31, 1
      %p112 = scmp.ne.s32.totalorder %s107, %s109
      %p113 = scmp.eq.s32.totalorder %s31, 0
      %p114 = por %p112, %p113
      %p115 = scmp.ne.s32.totalorder %s107, %s109
      %p116 = scmp.eq.s32.totalorder %s36, 1
      %p117 = por %p115, %p116
      %p118 = scmp.ne.s32.totalorder %s109, %s110
      %p119 = scmp.eq.s32.totalorder %s36, 0
      %p120 = por %p118, %p119
      %p121 = scmp.ne.s32.totalorder %s109, %s110
      %p122 = scmp.eq.s32.totalorder %s37, 1
      %p123 = por %p121, %p122
      %p125 = scmp.ne.s32.totalorder %s110, %s124
      %p126 = scmp.eq.s32.totalorder %s37, 0
      %p127 = por %p125, %p126
      %s129 = sadd.s32 %s128, 1
      %p132 = scmp.eq.s32.totalorder %s31, 1
      %p133 = scmp.ne.s32.totalorder %s128, %s130
      %p134 = scmp.eq.s32.totalorder %s31, 0
      %p135 = por %p133, %p134
      %p136 = scmp.ne.s32.totalorder %s128, %s130
      %p137 = scmp.eq.s32.totalorder %s36, 1
      %p138 = por %p136, %p137
      %p139 = scmp.ne.s32.totalorder %s130, %s131
      %p140 = scmp.eq.s32.totalorder %s36, 0
      %p141 = por %p139, %p140
      %p142 = scmp.ne.s32.totalorder %s130, %s131
      %p143 = scmp.eq.s32.totalorder %s37, 1
      %p144 = por %p142, %p143
      %p146 = scmp.ne.s32.totalorder %s131, %s145
      %p147 = scmp.eq.s32.totalorder %s37, 0
      %p148 = por %p146, %p147
      %s150 = sadd.s32 %s149, 1
      %p153 = scmp.eq.s32.totalorder %s31, 1
      %p154 = scmp.ne.s32.totalorder %s149, %s151
      %p155 = scmp.eq.s32.totalorder %s31, 0
      %p156 = por %p154, %p155
      %p157 = scmp.ne.s32.totalorder %s149, %s151
      %p158 = scmp.eq.s32.totalorder %s36, 1
      %p159 = por %p157, %p158
      %p160 = scmp.ne.s32.totalorder %s151, %s152
      %p161 = scmp.eq.s32.totalorder %s36, 0
      %p162 = por %p160, %p161
      %p163 = scmp.ne.s32.totalorder %s151, %s152
      %p164 = scmp.eq.s32.totalorder %s37, 1
      %p165 = por %p163, %p164
      %p167 = scmp.ne.s32.totalorder %s152, %s166
      %p168 = scmp.eq.s32.totalorder %s37, 0
      %p169 = por %p167, %p168
      %s171 = sadd.s32 %s170, 1
      %p174 = scmp.eq.s32.totalorder %s31, 1
      %p175 = scmp.ne.s32.totalorder %s170, %s172
      %p176 = scmp.eq.s32.totalorder %s31, 0
      %p177 = por %p175, %p176
      %p178 = scmp.ne.s32.totalorder %s170, %s172
      %p179 = scmp.eq.s32.totalorder %s36, 1
      %p180 = por %p178, %p179
      %p181 = scmp.ne.s32.totalorder %s172, %s173
      %p182 = scmp.eq.s32.totalorder %s36, 0
      %p183 = por %p181, %p182
      %p184 = scmp.ne.s32.totalorder %s172, %s173
      %p185 = scmp.eq.s32.totalorder %s37, 1
      %p186 = por %p184, %p185
      %p188 = scmp.ne.s32.totalorder %s173, %s187
      %p189 = scmp.eq.s32.totalorder %s37, 0
      %p190 = por %p188, %p189
      %s192 = sadd.s32 %s191, 1
      %p195 = scmp.eq.s32.totalorder %s31, 1
      %p196 = scmp.ne.s32.totalorder %s191, %s193
      %p197 = scmp.eq.s32.totalorder %s31, 0
      %p198 = por %p196, %p197
      %p199 = scmp.ne.s32.totalorder %s191, %s193
      %p200 = scmp.eq.s32.totalorder %s36, 1
      %p201 = por %p199, %p200
      %p202 = scmp.ne.s32.totalorder %s193, %s194
      %p203 = scmp.eq.s32.totalorder %s36, 0
      %p204 = por %p202, %p203
      %p205 = scmp.ne.s32.totalorder %s193, %s194
      %p206 = scmp.eq.s32.totalorder %s37, 1
      %p207 = por %p205, %p206
      %p209 = scmp.ne.s32.totalorder %s194, %s208
      %p210 = scmp.eq.s32.totalorder %s37, 0
      %p211 = por %p209, %p210
      %s213 = sadd.s32 %s212, 1
      %p216 = scmp.eq.s32.totalorder %s31, 1
      %p217 = scmp.ne.s32.totalorder %s212, %s214
      %p218 = scmp.eq.s32.totalorder %s31, 0
      %p219 = por %p217, %p218
      %p220 = scmp.ne.s32.totalorder %s212, %s214
      %p221 = scmp.eq.s32.totalorder %s36, 1
      %p222 = por %p220, %p221
      %p223 = scmp.ne.s32.totalorder %s214, %s215
      %p224 = scmp.eq.s32.totalorder %s36, 0
      %p225 = por %p223, %p224
      %p226 = scmp.ne.s32.totalorder %s214, %s215
      %p227 = scmp.eq.s32.totalorder %s37, 1
      %p228 = por %p226, %p227
      %p230 = scmp.ne.s32.totalorder %s215, %s229
      %p231 = scmp.eq.s32.totalorder %s37, 0
      %p232 = por %p230, %p231
      %s234 = sadd.s32 %s233, 1
      %p237 = scmp.eq.s32.totalorder %s31, 1
      %p238 = scmp.ne.s32.totalorder %s233, %s235
      %p239 = scmp.eq.s32.totalorder %s31, 0
      %p240 = por %p238, %p239
      %p241 = scmp.ne.s32.totalorder %s233, %s235
      %p242 = scmp.eq.s32.totalorder %s36, 1
      %p243 = por %p241, %p242
      %p244 = scmp.ne.s32.totalorder %s235, %s236
      %p245 = scmp.eq.s32.totalorder %s36, 0
      %p246 = por %p244, %p245
      %p247 = scmp.ne.s32.totalorder %s235, %s236
      %p248 = scmp.eq.s32.totalorder %s37, 1
      %p249 = por %p247, %p248
      %p251 = scmp.ne.s32.totalorder %s236, %s250
      %p252 = scmp.eq.s32.totalorder %s37, 0
      %p253 = por %p251, %p252
      %s255 = sadd.s32 %s254, 1
      %p258 = scmp.eq.s32.totalorder %s31, 1
      %p259 = scmp.ne.s32.totalorder %s254, %s256
      %p260 = scmp.eq.s32.totalorder %s31, 0
      %p261 = por %p259, %p260
      %p262 = scmp.ne.s32.totalorder %s254, %s256
      %p263 = scmp.eq.s32.totalorder %s36, 1
      %p264 = por %p262, %p263
      %p265 = scmp.ne.s32.totalorder %s256, %s257
      %p266 = scmp.eq.s32.totalorder %s36, 0
      %p267 = por %p265, %p266
      %p268 = scmp.ne.s32.totalorder %s256, %s257
      %p269 = scmp.eq.s32.totalorder %s37, 1
      %p270 = por %p268, %p269
      %p272 = scmp.ne.s32.totalorder %s257, %s271
      %p273 = scmp.eq.s32.totalorder %s37, 0
      %p274 = por %p272, %p273
      %s276 = sadd.s32 %s275, 1
      %p279 = scmp.eq.s32.totalorder %s31, 1
      %p280 = scmp.ne.s32.totalorder %s275, %s277
      %p281 = scmp.eq.s32.totalorder %s31, 0
      %p282 = por %p280, %p281
      %p283 = scmp.ne.s32.totalorder %s275, %s277
      %p284 = scmp.eq.s32.totalorder %s36, 1
      %p285 = por %p283, %p284
      %p286 = scmp.ne.s32.totalorder %s277, %s278
      %p287 = scmp.eq.s32.totalorder %s36, 0
      %p288 = por %p286, %p287
      %p289 = scmp.ne.s32.totalorder %s277, %s278
      %p290 = scmp.eq.s32.totalorder %s37, 1
      %p291 = por %p289, %p290
      %p293 = scmp.ne.s32.totalorder %s278, %s292
      %p294 = scmp.eq.s32.totalorder %s37, 0
      %p295 = por %p293, %p294
      %s297 = sadd.s32 %s296, 1
      %p300 = scmp.eq.s32.totalorder %s31, 1
      %p301 = scmp.ne.s32.totalorder %s296, %s298
      %p302 = scmp.eq.s32.totalorder %s31, 0
      %p303 = por %p301, %p302
      %p304 = scmp.ne.s32.totalorder %s296, %s298
      %p305 = scmp.eq.s32.totalorder %s36, 1
      %p306 = por %p304, %p305
      %p307 = scmp.ne.s32.totalorder %s298, %s299
      %p308 = scmp.eq.s32.totalorder %s36, 0
      %p309 = por %p307, %p308
      %p310 = scmp.ne.s32.totalorder %s298, %s299
      %p311 = scmp.eq.s32.totalorder %s37, 1
      %p312 = por %p310, %p311
      %p314 = scmp.ne.s32.totalorder %s299, %s313
      %p315 = scmp.eq.s32.totalorder %s37, 0
      %p316 = por %p314, %p315
      %s318 = sadd.s32 %s317, 1
      %p321 = scmp.eq.s32.totalorder %s31, 1
      %p322 = scmp.ne.s32.totalorder %s317, %s319
      %p323 = scmp.eq.s32.totalorder %s31, 0
      %p324 = por %p322, %p323
      %p325 = scmp.ne.s32.totalorder %s317, %s319
      %p326 = scmp.eq.s32.totalorder %s36, 1
      %p327 = por %p325, %p326
      %p328 = scmp.ne.s32.totalorder %s319, %s320
      %p329 = scmp.eq.s32.totalorder %s36, 0
      %p330 = por %p328, %p329
      %p331 = scmp.ne.s32.totalorder %s319, %s320
      %p332 = scmp.eq.s32.totalorder %s37, 1
      %p333 = por %p331, %p332
      %p335 = scmp.ne.s32.totalorder %s320, %s334
      %p336 = scmp.eq.s32.totalorder %s37, 0
      %p337 = por %p335, %p336
      %s339 = sadd.s32 %s338, 1
      %p342 = scmp.eq.s32.totalorder %s31, 1
      %p343 = scmp.ne.s32.totalorder %s338, %s340
      %p344 = scmp.eq.s32.totalorder %s31, 0
      %p345 = por %p343, %p344
      %p346 = scmp.ne.s32.totalorder %s338, %s340
      %p347 = scmp.eq.s32.totalorder %s36, 1
      %p348 = por %p346, %p347
      %p349 = scmp.ne.s32.totalorder %s340, %s341
      %p350 = scmp.eq.s32.totalorder %s36, 0
      %p351 = por %p349, %p350
      %p352 = scmp.ne.s32.totalorder %s340, %s341
      %p353 = scmp.eq.s32.totalorder %s37, 1
      %p354 = por %p352, %p353
      %p356 = scmp.ne.s32.totalorder %s341, %s355
      %p357 = scmp.eq.s32.totalorder %s37, 0
      %p358 = por %p356, %p357
      %s360 = sadd.s32 %s359, 1
      %p363 = scmp.eq.s32.totalorder %s31, 1
      %p364 = scmp.ne.s32.totalorder %s359, %s361
      %p365 = scmp.eq.s32.totalorder %s31, 0
      %p366 = por %p364, %p365
      %p367 = scmp.ne.s32.totalorder %s359, %s361
      %p368 = scmp.eq.s32.totalorder %s36, 1
      %p369 = por %p367, %p368
      %p370 = scmp.ne.s32.totalorder %s361, %s362
      %p371 = scmp.eq.s32.totalorder %s36, 0
      %p372 = por %p370, %p371
      %p373 = scmp.ne.s32.totalorder %s361, %s362
      %p374 = scmp.eq.s32.totalorder %s37, 1
      %p375 = por %p373, %p374
      %p377 = scmp.ne.s32.totalorder %s362, %s376
      %p378 = scmp.eq.s32.totalorder %s37, 0
      %p379 = por %p377, %p378
      %s381 = sadd.s32 %s380, 1
      %p384 = scmp.eq.s32.totalorder %s31, 1
      %p385 = scmp.ne.s32.totalorder %s380, %s382
      %p386 = scmp.eq.s32.totalorder %s31, 0
      %p387 = por %p385, %p386
      %p388 = scmp.ne.s32.totalorder %s380, %s382
      %p389 = scmp.eq.s32.totalorder %s36, 1
      %p390 = por %p388, %p389
      %p391 = scmp.ne.s32.totalorder %s382, %s383
      %p392 = scmp.eq.s32.totalorder %s36, 0
      %p393 = por %p391, %p392
      %p394 = scmp.ne.s32.totalorder %s382, %s383
      %p395 = scmp.eq.s32.totalorder %s37, 1
      %p396 = por %p394, %p395
      %p398 = scmp.ne.s32.totalorder %s383, %s397
      %p399 = scmp.eq.s32.totalorder %s37, 0
      %p400 = por %p398, %p399
      %s401 = ssub.s32 %s31, %s38
      %p402 = scmp.eq.s32.totalorder %s401, 0
      %s404 = sadd.s32 %s403, 1
      %s405 = scalar_select %p402, %s403, %s404
      %p408 = pneg %p402
      %p409 = scmp.eq.s32.totalorder %s31, 1
      %p410 = por %p408, %p409
      %p411 = scmp.ne.s32.totalorder %s403, %s406
      %p412 = scmp.eq.s32.totalorder %s31, 0
      %p413 = por %p411, %p412
      %p414 = scmp.ne.s32.totalorder %s403, %s406
      %p415 = scmp.eq.s32.totalorder %s36, 1
      %p416 = por %p414, %p415
      %p417 = scmp.ne.s32.totalorder %s406, %s407
      %p418 = scmp.eq.s32.totalorder %s36, 0
      %p419 = por %p417, %p418
      %p420 = scmp.ne.s32.totalorder %s406, %s407
      %p421 = scmp.eq.s32.totalorder %s37, 1
      %p422 = por %p420, %p421
      %p424 = scmp.ne.s32.totalorder %s407, %s423
      %p425 = scmp.eq.s32.totalorder %s37, 0
      %p426 = por %p424, %p425
      %s427 = ssub.s32 %s31, %s38
      %p428 = scmp.eq.s32.totalorder %s427, 0
      %s430 = sadd.s32 %s429, 1
      %s431 = scalar_select %p428, %s429, %s430
      %p434 = pneg %p428
      %p435 = scmp.eq.s32.totalorder %s31, 1
      %p436 = por %p434, %p435
      %p437 = scmp.ne.s32.totalorder %s429, %s432
      %p438 = scmp.eq.s32.totalorder %s31, 0
      %p439 = por %p437, %p438
      %p440 = scmp.ne.s32.totalorder %s429, %s432
      %p441 = scmp.eq.s32.totalorder %s36, 1
      %p442 = por %p440, %p441
      %p443 = scmp.ne.s32.totalorder %s432, %s433
      %p444 = scmp.eq.s32.totalorder %s36, 0
      %p445 = por %p443, %p444
      %p446 = scmp.ne.s32.totalorder %s432, %s433
      %p447 = scmp.eq.s32.totalorder %s37, 1
      %p448 = por %p446, %p447
      %p450 = scmp.ne.s32.totalorder %s433, %s449
      %p451 = scmp.eq.s32.totalorder %s37, 0
      %p452 = por %p450, %p451
      %p453 = scmp.le.s32.totalorder 1, %s31
      %p454 = scmp.lt.s32.totalorder %s31, 3
      %p455 = pnand %p453, %p454
      %p456 = pneg %p455
      // Predicated region
      $region9: #{tpu_custom_call.1} parent=5 // pred_check
        _
      $region10: #{tpu_custom_call.1} parent=5 // pred_check_branch
        %458 = sbr.rel (%p455) target = $region12
      $region11: #{tpu_custom_call.1} parent=5 // pred_region
        %s459 = ssub.s32 %s31, 1
        // Predicated region
        $region13: #{tpu_custom_call.1} parent=11 // pred_check
          %p460 = pneg %p78
        $region14: #{tpu_custom_call.1} parent=11 // pred_check_branch
          %462 = sbr.rel (%p460) target = $region16
        $region15: #{tpu_custom_call.1} parent=11 // pred_region
          _
        $region16: #{tpu_custom_call.1} parent=11 // pred_fallthru
          _
        // Predicated region
        $region17: #{tpu_custom_call.1} parent=11 // pred_check
          %p463 = pneg %p99
        $region18: #{tpu_custom_call.1} parent=11 // pred_check_branch
          %465 = sbr.rel (%p463) target = $region20
        $region19: #{tpu_custom_call.1} parent=11 // pred_region
          _
        $region20: #{tpu_custom_call.1} parent=11 // pred_fallthru
          _
        // Predicated region
        $region21: #{tpu_custom_call.1} parent=11 // pred_check
          %p466 = pneg %p120
        $region22: #{tpu_custom_call.1} parent=11 // pred_check_branch
          %468 = sbr.rel (%p466) target = $region24
        $region23: #{tpu_custom_call.1} parent=11 // pred_region
          _
        $region24: #{tpu_custom_call.1} parent=11 // pred_fallthru
          _
        // Predicated region
        $region25: #{tpu_custom_call.1} parent=11 // pred_check
          %p469 = pneg %p141
        $region26: #{tpu_custom_call.1} parent=11 // pred_check_branch
          %471 = sbr.rel (%p469) target = $region28
        $region27: #{tpu_custom_call.1} parent=11 // pred_region
          _
        $region28: #{tpu_custom_call.1} parent=11 // pred_fallthru
          _
        // Predicated region
        $region29: #{tpu_custom_call.1} parent=11 // pred_check
          %p472 = pneg %p162
        $region30: #{tpu_custom_call.1} parent=11 // pred_check_branch
          %474 = sbr.rel (%p472) target = $region32
        $region31: #{tpu_custom_call.1} parent=11 // pred_region
          _
        $region32: #{tpu_custom_call.1} parent=11 // pred_fallthru
          _
        // Predicated region
        $region33: #{tpu_custom_call.1} parent=11 // pred_check
          %p475 = pneg %p183
        $region34: #{tpu_custom_call.1} parent=11 // pred_check_branch
          %477 = sbr.rel (%p475) target = $region36
        $region35: #{tpu_custom_call.1} parent=11 // pred_region
          _
        $region36: #{tpu_custom_call.1} parent=11 // pred_fallthru
          _
        // Predicated region
        $region37: #{tpu_custom_call.1} parent=11 // pred_check
          %p478 = pneg %p204
        $region38: #{tpu_custom_call.1} parent=11 // pred_check_branch
          %480 = sbr.rel (%p478) target = $region40
        $region39: #{tpu_custom_call.1} parent=11 // pred_region
          _
        $region40: #{tpu_custom_call.1} parent=11 // pred_fallthru
          _
        // Predicated region
        $region41: #{tpu_custom_call.1} parent=11 // pred_check
          %p481 = pneg %p225
        $region42: #{tpu_custom_call.1} parent=11 // pred_check_branch
          %483 = sbr.rel (%p481) target = $region44
        $region43: #{tpu_custom_call.1} parent=11 // pred_region
          _
        $region44: #{tpu_custom_call.1} parent=11 // pred_fallthru
          _
        // Predicated region
        $region45: #{tpu_custom_call.1} parent=11 // pred_check
          %p484 = pneg %p246
        $region46: #{tpu_custom_call.1} parent=11 // pred_check_branch
          %486 = sbr.rel (%p484) target = $region48
        $region47: #{tpu_custom_call.1} parent=11 // pred_region
          _
        $region48: #{tpu_custom_call.1} parent=11 // pred_fallthru
          _
        // Predicated region
        $region49: #{tpu_custom_call.1} parent=11 // pred_check
          %p487 = pneg %p267
        $region50: #{tpu_custom_call.1} parent=11 // pred_check_branch
          %489 = sbr.rel (%p487) target = $region52
        $region51: #{tpu_custom_call.1} parent=11 // pred_region
          _
        $region52: #{tpu_custom_call.1} parent=11 // pred_fallthru
          _
        // Predicated region
        $region53: #{tpu_custom_call.1} parent=11 // pred_check
          %p490 = pneg %p288
        $region54: #{tpu_custom_call.1} parent=11 // pred_check_branch
          %492 = sbr.rel (%p490) target = $region56
        $region55: #{tpu_custom_call.1} parent=11 // pred_region
          _
        $region56: #{tpu_custom_call.1} parent=11 // pred_fallthru
          _
        // Predicated region
        $region57: #{tpu_custom_call.1} parent=11 // pred_check
          %p493 = pneg %p309
        $region58: #{tpu_custom_call.1} parent=11 // pred_check_branch
          %495 = sbr.rel (%p493) target = $region60
        $region59: #{tpu_custom_call.1} parent=11 // pred_region
          _
        $region60: #{tpu_custom_call.1} parent=11 // pred_fallthru
          _
        // Predicated region
        $region61: #{tpu_custom_call.1} parent=11 // pred_check
          %p496 = pneg %p330
        $region62: #{tpu_custom_call.1} parent=11 // pred_check_branch
          %498 = sbr.rel (%p496) target = $region64
        $region63: #{tpu_custom_call.1} parent=11 // pred_region
          _
        $region64: #{tpu_custom_call.1} parent=11 // pred_fallthru
          _
        // Predicated region
        $region65: #{tpu_custom_call.1} parent=11 // pred_check
          %p499 = pneg %p351
        $region66: #{tpu_custom_call.1} parent=11 // pred_check_branch
          %501 = sbr.rel (%p499) target = $region68
        $region67: #{tpu_custom_call.1} parent=11 // pred_region
          _
        $region68: #{tpu_custom_call.1} parent=11 // pred_fallthru
          _
        // Predicated region
        $region69: #{tpu_custom_call.1} parent=11 // pred_check
          %p502 = pneg %p372
        $region70: #{tpu_custom_call.1} parent=11 // pred_check_branch
          %504 = sbr.rel (%p502) target = $region72
        $region71: #{tpu_custom_call.1} parent=11 // pred_region
          _
        $region72: #{tpu_custom_call.1} parent=11 // pred_fallthru
          _
        // Predicated region
        $region73: #{tpu_custom_call.1} parent=11 // pred_check
          %p505 = pneg %p393
        $region74: #{tpu_custom_call.1} parent=11 // pred_check_branch
          %507 = sbr.rel (%p505) target = $region76
        $region75: #{tpu_custom_call.1} parent=11 // pred_region
          _
        $region76: #{tpu_custom_call.1} parent=11 // pred_fallthru
          _
      $region12: #{tpu_custom_call.1} parent=5 // pred_fallthru
        _
      %p508 = scmp.lt.s32.totalorder %s31, 2
      // Predicated region
      $region77: #{tpu_custom_call.1} parent=5 // pred_check
        %p509 = pneg %p508
      $region78: #{tpu_custom_call.1} parent=5 // pred_check_branch
        %511 = sbr.rel (%p509) target = $region80
      $region79: #{tpu_custom_call.1} parent=5 // pred_region
        // Predicated region
        $region81: #{tpu_custom_call.1} parent=79 // pred_check
          %p512 = pneg %p51
        $region82: #{tpu_custom_call.1} parent=79 // pred_check_branch
          %514 = sbr.rel (%p512) target = $region84
        $region83: #{tpu_custom_call.1} parent=79 // pred_region
          %s515 = smul.u32 64, %s31
          %p516 = scmp.lt.s32.totalorder %s515, 127
          %s517 = scalar_select %p516, %s515, 127
          %s518 = smul.addr %s517, 4
          %s519 = scalar_lea.vmem %s0, %s518
          %s520 = smul.u32 64, %s31
        $region84: #{tpu_custom_call.1} parent=79 // pred_fallthru
          _
      $region80: #{tpu_custom_call.1} parent=5 // pred_fallthru
        _
      %p521 = scmp.le.s32.totalorder 1, %s31
      %p522 = scmp.lt.s32.totalorder %s31, 3
      %p523 = pnand %p521, %p522
      %p524 = pneg %p523
      // Predicated region
      $region85: #{tpu_custom_call.1} parent=5 // pred_check
        _
      $region86: #{tpu_custom_call.1} parent=5 // pred_check_branch
        %526 = sbr.rel (%p523) target = $region88
      $region87: #{tpu_custom_call.1} parent=5 // pred_region
        %s527 = ssub.s32 %s31, 1
        %s528 = smul.u32 64, %s36
        %p529 = scmp.lt.s32.totalorder %s528, 127
        %s530 = scalar_select %p529, %s528, 127
        %s531 = smul.addr %s530, 4
        %s532 = scalar_lea.vmem %s0, %s531
        %p533 = pneg %p57
        %p534 = pneg %p54
        %p535 = pneg %p78
        %p536 = pneg %p75
        %p537 = pneg %p99
        %p538 = pneg %p96
        %p539 = pneg %p120
        %p540 = pneg %p117
        %p541 = pneg %p141
        %p542 = pneg %p138
        %p543 = pneg %p162
        %p544 = pneg %p159
        %p545 = pneg %p183
        %p546 = pneg %p180
        %p547 = pneg %p204
        %p548 = pneg %p201
        %p549 = pneg %p225
        %p550 = pneg %p222
        %p551 = pneg %p246
        %p552 = pneg %p243
        %p553 = pneg %p267
        %p554 = pneg %p264
        %p555 = pneg %p288
        %p556 = pneg %p285
        %p557 = pneg %p309
        %p558 = pneg %p306
        %p559 = pneg %p330
        %p560 = pneg %p327
        %p561 = pneg %p351
        %p562 = pneg %p348
        %p563 = pneg %p372
        %p564 = pneg %p369
        %p565 = pneg %p393
        %p566 = pneg %p390
        %p567 = pneg %p419
        %p568 = pneg %p416
        %s569 = sand.u32 %s406, 1
        %s570 = scalar_lea.sflag [#allocation3], %s569
        %s571 = sand.u32 %s406, 1
        %s572 = smul.addr %s571, 2
        %s573 = scalar_lea.vmem [#allocation2], %s572
        %p574 = pneg %p445
        %p575 = pneg %p442
        %s576 = sand.u32 %s432, 1
        %s577 = scalar_lea.sflag [#allocation5], %s576
        %s578 = sand.u32 %s432, 1
        %s579 = smul.addr %s578, 2
        %s580 = scalar_lea.vmem [#allocation4], %s579
        %s581 = smul.u32 64, %s36
        %p582 = scmp.lt.s32.totalorder %s581, 127
        %s583 = scalar_select %p582, %s581, 127
        %s584 = smul.addr %s583, 4
        %s585 = scalar_lea.vmem %s0, %s584
        %s586 = smul.u32 64, %s36
        %v588 = vld [vmem:[%s585] sm:$0xf]
        %v589 = vld [vmem:[%s585 + $0x4] sm:$0xf]
        %v590 = vld [vmem:[%s585 + $0x8] sm:$0xf]
        %v591 = vld [vmem:[%s585 + $0xc] sm:$0xf]
        %v592 = vld [vmem:[%s585 + $0x10] sm:$0xf]
        %v593 = vld [vmem:[%s585 + $0x14] sm:$0xf]
        %v594 = vld [vmem:[%s585 + $0x18] sm:$0xf]
        %v595 = vld [vmem:[%s585 + $0x1c] sm:$0xf]
        %v596 = vld [vmem:[%s585 + $0x20] sm:$0xf]
        %v597 = vld [vmem:[%s585 + $0x24] sm:$0xf]
        %v598 = vld [vmem:[%s585 + $0x28] sm:$0xf]
        %v599 = vld [vmem:[%s585 + $0x2c] sm:$0xf]
        %v600 = vld [vmem:[%s585 + $0x30] sm:$0xf]
        %v601 = vld [vmem:[%s585 + $0x34] sm:$0xf]
        %v602 = vld [vmem:[%s585 + $0x38] sm:$0xf]
        %v603 = vld [vmem:[%s585 + $0x3c] sm:$0xf]
        %v604 = vld [vmem:[%s585 + $0x40] sm:$0xf]
        %v605 = vld [vmem:[%s585 + $0x44] sm:$0xf]
        %v606 = vld [vmem:[%s585 + $0x48] sm:$0xf]
        %v607 = vld [vmem:[%s585 + $0x4c] sm:$0xf]
        %v608 = vld [vmem:[%s585 + $0x50] sm:$0xf]
        %v609 = vld [vmem:[%s585 + $0x54] sm:$0xf]
        %v610 = vld [vmem:[%s585 + $0x58] sm:$0xf]
        %v611 = vld [vmem:[%s585 + $0x5c] sm:$0xf]
        %v612 = vld [vmem:[%s585 + $0x60] sm:$0xf]
        %v613 = vld [vmem:[%s585 + $0x64] sm:$0xf]
        %v614 = vld [vmem:[%s585 + $0x68] sm:$0xf]
        %v615 = vld [vmem:[%s585 + $0x6c] sm:$0xf]
        %v616 = vld [vmem:[%s585 + $0x70] sm:$0xf]
        %v617 = vld [vmem:[%s585 + $0x74] sm:$0xf]
        %v618 = vld [vmem:[%s585 + $0x78] sm:$0xf]
        %v619 = vld [vmem:[%s585 + $0x7c] sm:$0xf]
        %v620 = vld [vmem:[%s585 + $0x80] sm:$0xf]
        %v621 = vld [vmem:[%s585 + $0x84] sm:$0xf]
        %v622 = vld [vmem:[%s585 + $0x88] sm:$0xf]
        %v623 = vld [vmem:[%s585 + $0x8c] sm:$0xf]
        %v624 = vld [vmem:[%s585 + $0x90] sm:$0xf]
        %v625 = vld [vmem:[%s585 + $0x94] sm:$0xf]
        %v626 = vld [vmem:[%s585 + $0x98] sm:$0xf]
        %v627 = vld [vmem:[%s585 + $0x9c] sm:$0xf]
        %v628 = vld [vmem:[%s585 + $0xa0] sm:$0xf]
        %v629 = vld [vmem:[%s585 + $0xa4] sm:$0xf]
        %v630 = vld [vmem:[%s585 + $0xa8] sm:$0xf]
        %v631 = vld [vmem:[%s585 + $0xac] sm:$0xf]
        %v632 = vld [vmem:[%s585 + $0xb0] sm:$0xf]
        %v633 = vld [vmem:[%s585 + $0xb4] sm:$0xf]
        %v634 = vld [vmem:[%s585 + $0xb8] sm:$0xf]
        %v635 = vld [vmem:[%s585 + $0xbc] sm:$0xf]
        %v636 = vld [vmem:[%s585 + $0xc0] sm:$0xf]
        %v637 = vld [vmem:[%s585 + $0xc4] sm:$0xf]
        %v638 = vld [vmem:[%s585 + $0xc8] sm:$0xf]
        %v639 = vld [vmem:[%s585 + $0xcc] sm:$0xf]
        %v640 = vld [vmem:[%s585 + $0xd0] sm:$0xf]
        %v641 = vld [vmem:[%s585 + $0xd4] sm:$0xf]
        %v642 = vld [vmem:[%s585 + $0xd8] sm:$0xf]
        %v643 = vld [vmem:[%s585 + $0xdc] sm:$0xf]
        %v644 = vld [vmem:[%s585 + $0xe0] sm:$0xf]
        %v645 = vld [vmem:[%s585 + $0xe4] sm:$0xf]
        %v646 = vld [vmem:[%s585 + $0xe8] sm:$0xf]
        %v647 = vld [vmem:[%s585 + $0xec] sm:$0xf]
        %v648 = vld [vmem:[%s585 + $0xf0] sm:$0xf]
        %v649 = vld [vmem:[%s585 + $0xf4] sm:$0xf]
        %v650 = vld [vmem:[%s585 + $0xf8] sm:$0xf]
        %v651 = vld [vmem:[%s585 + $0xfc] sm:$0xf]
        %v652 = vld [vmem:[%s1] sm:$0xf]
        %v653 = vld [vmem:[%s1 + $0x4] sm:$0xf]
        %v654 = vld [vmem:[%s1 + $0x8] sm:$0xf]
        %v655 = vld [vmem:[%s1 + $0xc] sm:$0xf]
        %v656 = vld [vmem:[%s1 + $0x10] sm:$0x3]
        %v657 = vld [vmem:[%s2] sm:$0x1]
        %v659 = vlaneseq
        %v660 = vshrl.u32 %v659, 7
        %v661 = vsub.s32 0, %v660
        %v662 = vrot.slane %v657, %v661
        %v728 = vunpack.c.l.b16 %v588
        %v729 = vunpack.c.l.b16 %v589
        %v730 = vunpack.c.l.b16 %v590
        %v731 = vunpack.c.l.b16 %v591
        %v732 = vunpack.c.l.b16 %v592
        %v733 = vunpack.c.l.b16 %v593
        %v734 = vunpack.c.l.b16 %v594
        %v735 = vunpack.c.l.b16 %v595
        %v736 = vunpack.c.l.b16 %v596
        %v737 = vunpack.c.l.b16 %v597
        %v738 = vunpack.c.l.b16 %v598
        %v739 = vunpack.c.l.b16 %v599
        %v740 = vunpack.c.l.b16 %v600
        %v741 = vunpack.c.l.b16 %v601
        %v742 = vunpack.c.l.b16 %v602
        %v743 = vunpack.c.l.b16 %v603
        %v744 = vunpack.c.l.b16 %v604
        %v745 = vunpack.c.l.b16 %v605
        %v746 = vunpack.c.l.b16 %v606
        %v747 = vunpack.c.l.b16 %v607
        %v748 = vunpack.c.l.b16 %v608
        %v749 = vunpack.c.l.b16 %v609
        %v750 = vunpack.c.l.b16 %v610
        %v751 = vunpack.c.l.b16 %v611
        %v752 = vunpack.c.l.b16 %v612
        %v753 = vunpack.c.l.b16 %v613
        %v754 = vunpack.c.l.b16 %v614
        %v755 = vunpack.c.l.b16 %v615
        %v756 = vunpack.c.l.b16 %v616
        %v757 = vunpack.c.l.b16 %v617
        %v758 = vunpack.c.l.b16 %v618
        %v759 = vunpack.c.l.b16 %v619
        %v760 = vunpack.c.l.b16 %v620
        %v761 = vunpack.c.l.b16 %v621
        %v762 = vunpack.c.l.b16 %v622
        %v763 = vunpack.c.l.b16 %v623
        %v764 = vunpack.c.l.b16 %v624
        %v765 = vunpack.c.l.b16 %v625
        %v766 = vunpack.c.l.b16 %v626
        %v767 = vunpack.c.l.b16 %v627
        %v768 = vunpack.c.l.b16 %v628
        %v769 = vunpack.c.l.b16 %v629
        %v770 = vunpack.c.l.b16 %v630
        %v771 = vunpack.c.l.b16 %v631
        %v772 = vunpack.c.l.b16 %v632
        %v773 = vunpack.c.l.b16 %v633
        %v774 = vunpack.c.l.b16 %v634
        %v775 = vunpack.c.l.b16 %v635
        %v776 = vunpack.c.l.b16 %v636
        %v777 = vunpack.c.l.b16 %v637
        %v778 = vunpack.c.l.b16 %v638
        %v779 = vunpack.c.l.b16 %v639
        %v780 = vunpack.c.l.b16 %v640
        %v781 = vunpack.c.l.b16 %v641
        %v782 = vunpack.c.l.b16 %v642
        %v783 = vunpack.c.l.b16 %v643
        %v784 = vunpack.c.l.b16 %v644
        %v785 = vunpack.c.l.b16 %v645
        %v786 = vunpack.c.l.b16 %v646
        %v787 = vunpack.c.l.b16 %v647
        %v788 = vunpack.c.l.b16 %v648
        %v789 = vunpack.c.l.b16 %v649
        %v790 = vunpack.c.l.b16 %v650
        %v791 = vunpack.c.l.b16 %v651
        %v792 = vpack.c.b16 %v729, %v728
        %v793 = vpack.c.b16 %v731, %v730
        %v794 = vpack.c.b16 %v733, %v732
        %v795 = vpack.c.b16 %v735, %v734
        %v796 = vpack.c.b16 %v737, %v736
        %v797 = vpack.c.b16 %v739, %v738
        %v798 = vpack.c.b16 %v741, %v740
        %v799 = vpack.c.b16 %v743, %v742
        %v800 = vpack.c.b16 %v745, %v744
        %v801 = vpack.c.b16 %v747, %v746
        %v802 = vpack.c.b16 %v749, %v748
        %v803 = vpack.c.b16 %v751, %v750
        %v804 = vpack.c.b16 %v753, %v752
        %v805 = vpack.c.b16 %v755, %v754
        %v806 = vpack.c.b16 %v757, %v756
        %v807 = vpack.c.b16 %v759, %v758
        %v808 = vpack.c.b16 %v761, %v760
        %v809 = vpack.c.b16 %v763, %v762
        %v810 = vpack.c.b16 %v765, %v764
        %v811 = vpack.c.b16 %v767, %v766
        %v812 = vpack.c.b16 %v769, %v768
        %v813 = vpack.c.b16 %v771, %v770
        %v814 = vpack.c.b16 %v773, %v772
        %v815 = vpack.c.b16 %v775, %v774
        %v816 = vpack.c.b16 %v777, %v776
        %v817 = vpack.c.b16 %v779, %v778
        %v818 = vpack.c.b16 %v781, %v780
        %v819 = vpack.c.b16 %v783, %v782
        %v820 = vpack.c.b16 %v785, %v784
        %v821 = vpack.c.b16 %v787, %v786
        %v822 = vpack.c.b16 %v789, %v788
        %v823 = vpack.c.b16 %v791, %v790
        %v829 = vunpack.c.l.b16 %v652
        %v830 = vunpack.c.l.b16 %v653
        %v831 = vunpack.c.l.b16 %v654
        %v832 = vunpack.c.l.b16 %v655
        %v833 = vunpack.c.l.b16 %v656
        %v834 = vpack.c.b16 %v830, %v829
        %v835 = vpack.c.b16 %v832, %v831
        %v836 = vpack.c.b16 %v833, %v833
        %vm839 = vcmask 293888
        %v841 = vsel %vm839, %v792, 0
        %v844 = vsel %vm839, %v793, 0
        %v847 = vsel %vm839, %v794, 0
        %v850 = vsel %vm839, %v795, 0
        %v853 = vsel %vm839, %v796, 0
        %v856 = vsel %vm839, %v797, 0
        %v859 = vsel %vm839, %v798, 0
        %v862 = vsel %vm839, %v799, 0
        %v865 = vsel %vm839, %v800, 0
        %v868 = vsel %vm839, %v801, 0
        %v871 = vsel %vm839, %v802, 0
        %v874 = vsel %vm839, %v803, 0
        %v877 = vsel %vm839, %v804, 0
        %v880 = vsel %vm839, %v805, 0
        %v883 = vsel %vm839, %v806, 0
        %v886 = vsel %vm839, %v807, 0
        %v889 = vsel %vm839, %v808, 0
        %v892 = vsel %vm839, %v809, 0
        %v895 = vsel %vm839, %v810, 0
        %v898 = vsel %vm839, %v811, 0
        %v901 = vsel %vm839, %v812, 0
        %v904 = vsel %vm839, %v813, 0
        %v907 = vsel %vm839, %v814, 0
        %v910 = vsel %vm839, %v815, 0
        %v913 = vsel %vm839, %v816, 0
        %v916 = vsel %vm839, %v817, 0
        %v919 = vsel %vm839, %v818, 0
        %v922 = vsel %vm839, %v819, 0
        %v925 = vsel %vm839, %v820, 0
        %v928 = vsel %vm839, %v821, 0
        %v931 = vsel %vm839, %v822, 0
        %v934 = vsel %vm839, %v823, 0
        %vm936 = vcmask 1041408
        %v938 = vsel %vm936, %v836, 0
        %940 = vmatprep.subr.bf16.mxu0 0
        %941 = vmatpush1.bf16.msra.mxu0 %v834
        %942 = vmatprep.subr.bf16.mxu0 0
        %943 = vmatpush1.bf16.msra.mxu0 %v835
        %944 = vmatprep.subr.bf16.mxu0 0
        %945 = vmatpush1.bf16.msra.mxu0 %v938
        %946 = vmatprep.subr.bf16.mxu0 0
        %947 = vmatpush1.bf16.msra.mxu0 0
        %948 = vmatprep.subr.bf16.mxu0 0
        %949 = vmatpush1.bf16.msra.mxu0 0
        %950 = vmatprep.subr.bf16.mxu0 0
        %951 = vmatpush1.bf16.msra.mxu0 0
        %952 = vmatprep.subr.bf16.mxu0 0
        %953 = vmatpush1.bf16.msra.mxu0 0
        %954 = vmatprep.subr.bf16.mxu0 0
        %955 = vmatpush1.bf16.msra.mxu0 0
        %956 = vmatprep.subr.bf16.mxu0 0
        %957 = vmatpush1.bf16.msra.mxu0 0
        %958 = vmatprep.subr.bf16.mxu0 0
        %959 = vmatpush1.bf16.msra.mxu0 0
        %960 = vmatprep.subr.bf16.mxu0 0
        %961 = vmatpush1.bf16.msra.mxu0 0
        %962 = vmatprep.subr.bf16.mxu0 0
        %963 = vmatpush1.bf16.msra.mxu0 0
        %964 = vmatprep.subr.bf16.mxu0 0
        %965 = vmatpush1.bf16.msra.mxu0 0
        %966 = vmatprep.subr.bf16.mxu0 0
        %967 = vmatpush1.bf16.msra.mxu0 0
        %968 = vmatprep.subr.bf16.mxu0 0
        %969 = vmatpush1.bf16.msra.mxu0 0
        %970 = vmatprep.subr.bf16.mxu0 0
        %971 = vmatpush1.bf16.msra.mxu0 0
        %972 = vmatprep.mubr.bf16.mxu0 0
        %973 = vmatmul.mubr.bf16.gmra.mrb[0].mxu0 %v841
        %v974 = vpop.f32.mrb[0].mxu0
        %v975 = vadd.f32 %v662, %v974
        %v976 = vpop.f32.mrb[0].mxu0
        %v977 = vpop.f32.mrb[0].mxu0
        %v978 = vadd.f32 %v662, %v977
        %v979 = vpop.f32.mrb[0].mxu0
        %980 = vmatprep.mubr.bf16.mxu0 0
        %981 = vmatmul.mubr.bf16.gmra.mrb[0].mxu0 %v844
        %v982 = vpop.f32.mrb[0].mxu0
        %v983 = vadd.f32 %v662, %v982
        %v984 = vpop.f32.mrb[0].mxu0
        %v985 = vpop.f32.mrb[0].mxu0
        %v986 = vadd.f32 %v662, %v985
        %v987 = vpop.f32.mrb[0].mxu0
        %988 = vmatprep.mubr.bf16.mxu0 0
        %989 = vmatmul.mubr.bf16.gmra.mrb[0].mxu0 %v847
        %v990 = vpop.f32.mrb[0].mxu0
        %v991 = vadd.f32 %v662, %v990
        %v992 = vpop.f32.mrb[0].mxu0
        %v993 = vpop.f32.mrb[0].mxu0
        %v994 = vadd.f32 %v662, %v993
        %v995 = vpop.f32.mrb[0].mxu0
        %996 = vmatprep.mubr.bf16.mxu0 0
        %997 = vmatmul.mubr.bf16.gmra.mrb[0].mxu0 %v850
        %v998 = vpop.f32.mrb[0].mxu0
        %v999 = vadd.f32 %v662, %v998
        %v1000 = vpop.f32.mrb[0].mxu0
        %v1001 = vpop.f32.mrb[0].mxu0
        %v1002 = vadd.f32 %v662, %v1001
        %v1003 = vpop.f32.mrb[0].mxu0
        %1004 = vmatprep.mubr.bf16.mxu0 0
        %1005 = vmatmul.mubr.bf16.gmra.mrb[0].mxu0 %v853
        %v1006 = vpop.f32.mrb[0].mxu0
        %v1007 = vadd.f32 %v662, %v1006
        %v1008 = vpop.f32.mrb[0].mxu0
        %v1009 = vpop.f32.mrb[0].mxu0
        %v1010 = vadd.f32 %v662, %v1009
        %v1011 = vpop.f32.mrb[0].mxu0
        %1012 = vmatprep.mubr.bf16.mxu0 0
        %1013 = vmatmul.mubr.bf16.gmra.mrb[0].mxu0 %v856
        %v1014 = vpop.f32.mrb[0].mxu0
        %v1015 = vadd.f32 %v662, %v1014
        %v1016 = vpop.f32.mrb[0].mxu0
        %v1017 = vpop.f32.mrb[0].mxu0
        %v1018 = vadd.f32 %v662, %v1017
        %v1019 = vpop.f32.mrb[0].mxu0
        %1020 = vmatprep.mubr.bf16.mxu0 0
        %1021 = vmatmul.mubr.bf16.gmra.mrb[0].mxu0 %v859
        %v1022 = vpop.f32.mrb[0].mxu0
        %v1023 = vadd.f32 %v662, %v1022
        %v1024 = vpop.f32.mrb[0].mxu0
        %v1025 = vpop.f32.mrb[0].mxu0
        %v1026 = vadd.f32 %v662, %v1025
        %v1027 = vpop.f32.mrb[0].mxu0
        %1028 = vmatprep.mubr.bf16.mxu0 0
        %1029 = vmatmul.mubr.bf16.gmra.mrb[0].mxu0 %v862
        %v1030 = vpop.f32.mrb[0].mxu0
        %v1031 = vadd.f32 %v662, %v1030
        %v1032 = vpop.f32.mrb[0].mxu0
        %v1033 = vpop.f32.mrb[0].mxu0
        %v1034 = vadd.f32 %v662, %v1033
        %v1035 = vpop.f32.mrb[0].mxu0
        %1036 = vmatprep.mubr.bf16.mxu0 0
        %1037 = vmatmul.mubr.bf16.gmra.mrb[0].mxu0 %v865
        %v1038 = vpop.f32.mrb[0].mxu0
        %v1039 = vadd.f32 %v662, %v1038
        %v1040 = vpop.f32.mrb[0].mxu0
        %v1041 = vpop.f32.mrb[0].mxu0
        %v1042 = vadd.f32 %v662, %v1041
        %v1043 = vpop.f32.mrb[0].mxu0
        %1044 = vmatprep.mubr.bf16.mxu0 0
        %1045 = vmatmul.mubr.bf16.gmra.mrb[0].mxu0 %v868
        %v1046 = vpop.f32.mrb[0].mxu0
        %v1047 = vadd.f32 %v662, %v1046
        %v1048 = vpop.f32.mrb[0].mxu0
        %v1049 = vpop.f32.mrb[0].mxu0
        %v1050 = vadd.f32 %v662, %v1049
        %v1051 = vpop.f32.mrb[0].mxu0
        %1052 = vmatprep.mubr.bf16.mxu0 0
        %1053 = vmatmul.mubr.bf16.gmra.mrb[0].mxu0 %v871
        %v1054 = vpop.f32.mrb[0].mxu0
        %v1055 = vadd.f32 %v662, %v1054
        %v1056 = vpop.f32.mrb[0].mxu0
        %v1057 = vpop.f32.mrb[0].mxu0
        %v1058 = vadd.f32 %v662, %v1057
        %v1059 = vpop.f32.mrb[0].mxu0
        %1060 = vmatprep.mubr.bf16.mxu0 0
        %1061 = vmatmul.mubr.bf16.gmra.mrb[0].mxu0 %v874
        %v1062 = vpop.f32.mrb[0].mxu0
        %v1063 = vadd.f32 %v662, %v1062
        %v1064 = vpop.f32.mrb[0].mxu0
        %v1065 = vpop.f32.mrb[0].mxu0
        %v1066 = vadd.f32 %v662, %v1065
        %v1067 = vpop.f32.mrb[0].mxu0
        %1068 = vmatprep.mubr.bf16.mxu0 0
        %1069 = vmatmul.mubr.bf16.gmra.mrb[0].mxu0 %v877
        %v1070 = vpop.f32.mrb[0].mxu0
        %v1071 = vadd.f32 %v662, %v1070
        %v1072 = vpop.f32.mrb[0].mxu0
        %v1073 = vpop.f32.mrb[0].mxu0
        %v1074 = vadd.f32 %v662, %v1073
        %v1075 = vpop.f32.mrb[0].mxu0
        %1076 = vmatprep.mubr.bf16.mxu0 0
        %1077 = vmatmul.mubr.bf16.gmra.mrb[0].mxu0 %v880
        %v1078 = vpop.f32.mrb[0].mxu0
        %v1079 = vadd.f32 %v662, %v1078
        %v1080 = vpop.f32.mrb[0].mxu0
        %v1081 = vpop.f32.mrb[0].mxu0
        %v1082 = vadd.f32 %v662, %v1081
        %v1083 = vpop.f32.mrb[0].mxu0
        %1084 = vmatprep.mubr.bf16.mxu0 0
        %1085 = vmatmul.mubr.bf16.gmra.mrb[0].mxu0 %v883
        %v1086 = vpop.f32.mrb[0].mxu0
        %v1087 = vadd.f32 %v662, %v1086
        %v1088 = vpop.f32.mrb[0].mxu0
        %v1089 = vpop.f32.mrb[0].mxu0
        %v1090 = vadd.f32 %v662, %v1089
        %v1091 = vpop.f32.mrb[0].mxu0
        %1092 = vmatprep.mubr.bf16.mxu0 0
        %1093 = vmatmul.mubr.bf16.gmra.mrb[0].mxu0 %v886
        %v1094 = vpop.f32.mrb[0].mxu0
        %v1095 = vadd.f32 %v662, %v1094
        %v1096 = vpop.f32.mrb[0].mxu0
        %v1097 = vpop.f32.mrb[0].mxu0
        %v1098 = vadd.f32 %v662, %v1097
        %v1099 = vpop.f32.mrb[0].mxu0
        %1100 = vmatprep.mubr.bf16.mxu0 0
        %1101 = vmatmul.mubr.bf16.gmra.mrb[0].mxu0 %v889
        %v1102 = vpop.f32.mrb[0].mxu0
        %v1103 = vadd.f32 %v662, %v1102
        %v1104 = vpop.f32.mrb[0].mxu0
        %v1105 = vpop.f32.mrb[0].mxu0
        %v1106 = vadd.f32 %v662, %v1105
        %v1107 = vpop.f32.mrb[0].mxu0
        %1108 = vmatprep.mubr.bf16.mxu0 0
        %1109 = vmatmul.mubr.bf16.gmra.mrb[0].mxu0 %v892
        %v1110 = vpop.f32.mrb[0].mxu0
        %v1111 = vadd.f32 %v662, %v1110
        %v1112 = vpop.f32.mrb[0].mxu0
        %v1113 = vpop.f32.mrb[0].mxu0
        %v1114 = vadd.f32 %v662, %v1113
        %v1115 = vpop.f32.mrb[0].mxu0
        %1116 = vmatprep.mubr.bf16.mxu0 0
        %1117 = vmatmul.mubr.bf16.gmra.mrb[0].mxu0 %v895
        %v1118 = vpop.f32.mrb[0].mxu0
        %v1119 = vadd.f32 %v662, %v1118
        %v1120 = vpop.f32.mrb[0].mxu0
        %v1121 = vpop.f32.mrb[0].mxu0
        %v1122 = vadd.f32 %v662, %v1121
        %v1123 = vpop.f32.mrb[0].mxu0
        %1124 = vmatprep.mubr.bf16.mxu0 0
        %1125 = vmatmul.mubr.bf16.gmra.mrb[0].mxu0 %v898
        %v1126 = vpop.f32.mrb[0].mxu0
        %v1127 = vadd.f32 %v662, %v1126
        %v1128 = vpop.f32.mrb[0].mxu0
        %v1129 = vpop.f32.mrb[0].mxu0
        %v1130 = vadd.f32 %v662, %v1129
        %v1131 = vpop.f32.mrb[0].mxu0
        %1132 = vmatprep.mubr.bf16.mxu0 0
        %1133 = vmatmul.mubr.bf16.gmra.mrb[0].mxu0 %v901
        %v1134 = vpop.f32.mrb[0].mxu0
        %v1135 = vadd.f32 %v662, %v1134
        %v1136 = vpop.f32.mrb[0].mxu0
        %v1137 = vpop.f32.mrb[0].mxu0
        %v1138 = vadd.f32 %v662, %v1137
        %v1139 = vpop.f32.mrb[0].mxu0
        %1140 = vmatprep.mubr.bf16.mxu0 0
        %1141 = vmatmul.mubr.bf16.gmra.mrb[0].mxu0 %v904
        %v1142 = vpop.f32.mrb[0].mxu0
        %v1143 = vadd.f32 %v662, %v1142
        %v1144 = vpop.f32.mrb[0].mxu0
        %v1145 = vpop.f32.mrb[0].mxu0
        %v1146 = vadd.f32 %v662, %v1145
        %v1147 = vpop.f32.mrb[0].mxu0
        %1148 = vmatprep.mubr.bf16.mxu0 0
        %1149 = vmatmul.mubr.bf16.gmra.mrb[0].mxu0 %v907
        %v1150 = vpop.f32.mrb[0].mxu0
        %v1151 = vadd.f32 %v662, %v1150
        %v1152 = vpop.f32.mrb[0].mxu0
        %v1153 = vpop.f32.mrb[0].mxu0
        %v1154 = vadd.f32 %v662, %v1153
        %v1155 = vpop.f32.mrb[0].mxu0
        %1156 = vmatprep.mubr.bf16.mxu0 0
        %1157 = vmatmul.mubr.bf16.gmra.mrb[0].mxu0 %v910
        %v1158 = vpop.f32.mrb[0].mxu0
        %v1159 = vadd.f32 %v662, %v1158
        %v1160 = vpop.f32.mrb[0].mxu0
        %v1161 = vpop.f32.mrb[0].mxu0
        %v1162 = vadd.f32 %v662, %v1161
        %v1163 = vpop.f32.mrb[0].mxu0
        %1164 = vmatprep.mubr.bf16.mxu0 0
        %1165 = vmatmul.mubr.bf16.gmra.mrb[0].mxu0 %v913
        %v1166 = vpop.f32.mrb[0].mxu0
        %v1167 = vadd.f32 %v662, %v1166
        %v1168 = vpop.f32.mrb[0].mxu0
        %v1169 = vpop.f32.mrb[0].mxu0
        %v1170 = vadd.f32 %v662, %v1169
        %v1171 = vpop.f32.mrb[0].mxu0
        %1172 = vmatprep.mubr.bf16.mxu0 0
        %1173 = vmatmul.mubr.bf16.gmra.mrb[0].mxu0 %v916
        %v1174 = vpop.f32.mrb[0].mxu0
        %v1175 = vadd.f32 %v662, %v1174
        %v1176 = vpop.f32.mrb[0].mxu0
        %v1177 = vpop.f32.mrb[0].mxu0
        %v1178 = vadd.f32 %v662, %v1177
        %v1179 = vpop.f32.mrb[0].mxu0
        %1180 = vmatprep.mubr.bf16.mxu0 0
        %1181 = vmatmul.mubr.bf16.gmra.mrb[0].mxu0 %v919
        %v1182 = vpop.f32.mrb[0].mxu0
        %v1183 = vadd.f32 %v662, %v1182
        %v1184 = vpop.f32.mrb[0].mxu0
        %v1185 = vpop.f32.mrb[0].mxu0
        %v1186 = vadd.f32 %v662, %v1185
        %v1187 = vpop.f32.mrb[0].mxu0
        %1188 = vmatprep.mubr.bf16.mxu0 0
        %1189 = vmatmul.mubr.bf16.gmra.mrb[0].mxu0 %v922
        %v1190 = vpop.f32.mrb[0].mxu0
        %v1191 = vadd.f32 %v662, %v1190
        %v1192 = vpop.f32.mrb[0].mxu0
        %v1193 = vpop.f32.mrb[0].mxu0
        %v1194 = vadd.f32 %v662, %v1193
        %v1195 = vpop.f32.mrb[0].mxu0
        %1196 = vmatprep.mubr.bf16.mxu0 0
        %1197 = vmatmul.mubr.bf16.gmra.mrb[0].mxu0 %v925
        %v1198 = vpop.f32.mrb[0].mxu0
        %v1199 = vadd.f32 %v662, %v1198
        %v1200 = vpop.f32.mrb[0].mxu0
        %v1201 = vpop.f32.mrb[0].mxu0
        %v1202 = vadd.f32 %v662, %v1201
        %v1203 = vpop.f32.mrb[0].mxu0
        %1204 = vmatprep.mubr.bf16.mxu0 0
        %1205 = vmatmul.mubr.bf16.gmra.mrb[0].mxu0 %v928
        %v1206 = vpop.f32.mrb[0].mxu0
        %v1207 = vadd.f32 %v662, %v1206
        %v1208 = vpop.f32.mrb[0].mxu0
        %v1209 = vpop.f32.mrb[0].mxu0
        %v1210 = vadd.f32 %v662, %v1209
        %v1211 = vpop.f32.mrb[0].mxu0
        %1212 = vmatprep.mubr.bf16.mxu0 0
        %1213 = vmatmul.mubr.bf16.gmra.mrb[0].mxu0 %v931
        %v1214 = vpop.f32.mrb[0].mxu0
        %v1215 = vadd.f32 %v662, %v1214
        %v1216 = vpop.f32.mrb[0].mxu0
        %v1217 = vpop.f32.mrb[0].mxu0
        %v1218 = vadd.f32 %v662, %v1217
        %v1219 = vpop.f32.mrb[0].mxu0
        %1220 = vmatprep.mubr.bf16.mxu0 0
        %1221 = vmatmul.mubr.bf16.gmra.mrb[0].mxu0 %v934
        %v1222 = vpop.f32.mrb[0].mxu0
        %v1223 = vadd.f32 %v662, %v1222
        %v1224 = vpop.f32.mrb[0].mxu0
        %v1225 = vpop.f32.mrb[0].mxu0
        %v1226 = vadd.f32 %v662, %v1225
        %v1227 = vpop.f32.mrb[0].mxu0
        %1228 = vdwg.mxu0
        %v1229 = vmax.f32 %v975, 0.0
        %v1230 = vmax.f32 %v978, 0.0
        %v1231 = vmax.f32 %v983, 0.0
        %v1232 = vmax.f32 %v986, 0.0
        %v1233 = vmax.f32 %v991, 0.0
        %v1234 = vmax.f32 %v994, 0.0
        %v1235 = vmax.f32 %v999, 0.0
        %v1236 = vmax.f32 %v1002, 0.0
        %v1237 = vmax.f32 %v1007, 0.0
        %v1238 = vmax.f32 %v1010, 0.0
        %v1239 = vmax.f32 %v1015, 0.0
        %v1240 = vmax.f32 %v1018, 0.0
        %v1241 = vmax.f32 %v1023, 0.0
        %v1242 = vmax.f32 %v1026, 0.0
        %v1243 = vmax.f32 %v1031, 0.0
        %v1244 = vmax.f32 %v1034, 0.0
        %v1245 = vmax.f32 %v1039, 0.0
        %v1246 = vmax.f32 %v1042, 0.0
        %v1247 = vmax.f32 %v1047, 0.0
        %v1248 = vmax.f32 %v1050, 0.0
        %v1249 = vmax.f32 %v1055, 0.0
        %v1250 = vmax.f32 %v1058, 0.0
        %v1251 = vmax.f32 %v1063, 0.0
        %v1252 = vmax.f32 %v1066, 0.0
        %v1253 = vmax.f32 %v1071, 0.0
        %v1254 = vmax.f32 %v1074, 0.0
        %v1255 = vmax.f32 %v1079, 0.0
        %v1256 = vmax.f32 %v1082, 0.0
        %v1257 = vmax.f32 %v1087, 0.0
        %v1258 = vmax.f32 %v1090, 0.0
        %v1259 = vmax.f32 %v1095, 0.0
        %v1260 = vmax.f32 %v1098, 0.0
        %v1261 = vmax.f32 %v1103, 0.0
        %v1262 = vmax.f32 %v1106, 0.0
        %v1263 = vmax.f32 %v1111, 0.0
        %v1264 = vmax.f32 %v1114, 0.0
        %v1265 = vmax.f32 %v1119, 0.0
        %v1266 = vmax.f32 %v1122, 0.0
        %v1267 = vmax.f32 %v1127, 0.0
        %v1268 = vmax.f32 %v1130, 0.0
        %v1269 = vmax.f32 %v1135, 0.0
        %v1270 = vmax.f32 %v1138, 0.0
        %v1271 = vmax.f32 %v1143, 0.0
        %v1272 = vmax.f32 %v1146, 0.0
        %v1273 = vmax.f32 %v1151, 0.0
        %v1274 = vmax.f32 %v1154, 0.0
        %v1275 = vmax.f32 %v1159, 0.0
        %v1276 = vmax.f32 %v1162, 0.0
        %v1277 = vmax.f32 %v1167, 0.0
        %v1278 = vmax.f32 %v1170, 0.0
        %v1279 = vmax.f32 %v1175, 0.0
        %v1280 = vmax.f32 %v1178, 0.0
        %v1281 = vmax.f32 %v1183, 0.0
        %v1282 = vmax.f32 %v1186, 0.0
        %v1283 = vmax.f32 %v1191, 0.0
        %v1284 = vmax.f32 %v1194, 0.0
        %v1285 = vmax.f32 %v1199, 0.0
        %v1286 = vmax.f32 %v1202, 0.0
        %v1287 = vmax.f32 %v1207, 0.0
        %v1288 = vmax.f32 %v1210, 0.0
        %v1289 = vmax.f32 %v1215, 0.0
        %v1290 = vmax.f32 %v1218, 0.0
        %v1291 = vmax.f32 %v1223, 0.0
        %v1292 = vmax.f32 %v1226, 0.0
        %v1293 = vlaneseq
        %v1294 = vshrl.u32 %v1293, 7
        %v1295 = vlaneseq
        %v1296 = vand.u32 %v1295, 127
        %v1297 = vadd.s32 %v1296, 128
        %v1298 = vadd.s32 %v1296, 256
        %v1299 = vadd.s32 %v1296, 384
        %v1300 = vmul.u32 %v1294, 256
        %vm1301 = vcmp.ge.s32.totalorder %v1296, %v1300
        %vm1302 = vcmp.ge.s32.totalorder %v1297, %v1300
        %vm1303 = vcmp.ge.s32.totalorder %v1298, %v1300
        %vm1304 = vcmp.ge.s32.totalorder %v1299, %v1300
        %v1305 = vadd.s32 %v1294, 1
        %v1306 = vmul.u32 %v1305, 256
        %vm1307 = vcmp.lt.s32.totalorder %v1296, %v1306
        %vm1308 = vcmp.lt.s32.totalorder %v1297, %v1306
        %vm1309 = vcmp.lt.s32.totalorder %v1298, %v1306
        %vm1310 = vcmp.lt.s32.totalorder %v1299, %v1306
        %vm1311 = vmand %vm1301, %vm1307
        %vm1312 = vmand %vm1302, %vm1308
        %vm1313 = vmand %vm1303, %vm1309
        %vm1314 = vmand %vm1304, %vm1310
        %v1315 = vsel %vm1311, 0.00390625, 0.0
        %v1316 = vsel %vm1312, 0.00390625, 0.0
        %v1317 = vsel %vm1313, 0.00390625, 0.0
        %v1318 = vsel %vm1314, 0.00390625, 0.0
        %1319 = vmatprep.subr.mxu0 0.0
        %1320 = vmatpush1.msra.mxu0 %v1229
        %1321 = vmatprep.subr.mxu0 0.0
        %1322 = vmatpush1.msra.mxu0 %v1230
        %1323 = vmatprep.subr.mxu0 0.0
        %1324 = vmatpush1.msra.mxu0 %v1231
        %1325 = vmatprep.subr.mxu0 0.0
        %1326 = vmatpush1.msra.mxu0 %v1232
        %1327 = vmatprep.subr.mxu0 0.0
        %1328 = vmatpush1.msra.mxu0 %v1233
        %1329 = vmatprep.subr.mxu0 0.0
        %1330 = vmatpush1.msra.mxu0 %v1234
        %1331 = vmatprep.subr.mxu0 0.0
        %1332 = vmatpush1.msra.mxu0 %v1235
        %1333 = vmatprep.subr.mxu0 0.0
        %1334 = vmatpush1.msra.mxu0 %v1236
        %1335 = vmatprep.subr.mxu0 0.0
        %1336 = vmatpush1.msra.mxu0 %v1237
        %1337 = vmatprep.subr.mxu0 0.0
        %1338 = vmatpush1.msra.mxu0 %v1238
        %1339 = vmatprep.subr.mxu0 0.0
        %1340 = vmatpush1.msra.mxu0 %v1239
        %1341 = vmatprep.subr.mxu0 0.0
        %1342 = vmatpush1.msra.mxu0 %v1240
        %1343 = vmatprep.subr.mxu0 0.0
        %1344 = vmatpush1.msra.mxu0 %v1241
        %1345 = vmatprep.subr.mxu0 0.0
        %1346 = vmatpush1.msra.mxu0 %v1242
        %1347 = vmatprep.subr.mxu0 0.0
        %1348 = vmatpush1.msra.mxu0 %v1243
        %1349 = vmatprep.subr.mxu0 0.0
        %1350 = vmatpush1.msra.mxu0 %v1244
        %1351 = vmatprep.subr.mxu0 0.0
        %1352 = vmatpush1.msra.mxu0 %v1245
        %1353 = vmatprep.subr.mxu0 0.0
        %1354 = vmatpush1.msra.mxu0 %v1246
        %1355 = vmatprep.subr.mxu0 0.0
        %1356 = vmatpush1.msra.mxu0 %v1247
        %1357 = vmatprep.subr.mxu0 0.0
        %1358 = vmatpush1.msra.mxu0 %v1248
        %1359 = vmatprep.subr.mxu0 0.0
        %1360 = vmatpush1.msra.mxu0 %v1249
        %1361 = vmatprep.subr.mxu0 0.0
        %1362 = vmatpush1.msra.mxu0 %v1250
        %1363 = vmatprep.subr.mxu0 0.0
        %1364 = vmatpush1.msra.mxu0 %v1251
        %1365 = vmatprep.subr.mxu0 0.0
        %1366 = vmatpush1.msra.mxu0 %v1252
        %1367 = vmatprep.subr.mxu0 0.0
        %1368 = vmatpush1.msra.mxu0 %v1253
        %1369 = vmatprep.subr.mxu0 0.0
        %1370 = vmatpush1.msra.mxu0 %v1254
        %1371 = vmatprep.subr.mxu0 0.0
        %1372 = vmatpush1.msra.mxu0 %v1255
        %1373 = vmatprep.subr.mxu0 0.0
        %1374 = vmatpush1.msra.mxu0 %v1256
        %1375 = vmatprep.subr.mxu0 0.0
        %1376 = vmatpush1.msra.mxu0 %v1257
        %1377 = vmatprep.subr.mxu0 0.0
        %1378 = vmatpush1.msra.mxu0 %v1258
        %1379 = vmatprep.subr.mxu0 0.0
        %1380 = vmatpush1.msra.mxu0 %v1259
        %1381 = vmatprep.subr.mxu0 0.0
        %1382 = vmatpush1.msra.mxu0 %v1260
        %1383 = vmatprep.mubr.f32.mxu0 %v1316
        %1384 = vmatmul.mubr.f32.gmra.mrb[0].mxu0 %v1315
        %v1385 = vpop.f32.mrb[0].mxu0
        %v1386 = vadd.f32 0.0, %v1385
        %v1387 = vpop.f32.mrb[0].mxu0
        %1388 = vdwg.mxu0
        %1389 = vmatprep.subr.mxu0 0.0
        %1390 = vmatpush1.msra.mxu0 %v1261
        %1391 = vmatprep.subr.mxu0 0.0
        %1392 = vmatpush1.msra.mxu0 %v1262
        %1393 = vmatprep.subr.mxu0 0.0
        %1394 = vmatpush1.msra.mxu0 %v1263
        %1395 = vmatprep.subr.mxu0 0.0
        %1396 = vmatpush1.msra.mxu0 %v1264
        %1397 = vmatprep.subr.mxu0 0.0
        %1398 = vmatpush1.msra.mxu0 %v1265
        %1399 = vmatprep.subr.mxu0 0.0
        %1400 = vmatpush1.msra.mxu0 %v1266
        %1401 = vmatprep.subr.mxu0 0.0
        %1402 = vmatpush1.msra.mxu0 %v1267
        %1403 = vmatprep.subr.mxu0 0.0
        %1404 = vmatpush1.msra.mxu0 %v1268
        %1405 = vmatprep.subr.mxu0 0.0
        %1406 = vmatpush1.msra.mxu0 %v1269
        %1407 = vmatprep.subr.mxu0 0.0
        %1408 = vmatpush1.msra.mxu0 %v1270
        %1409 = vmatprep.subr.mxu0 0.0
        %1410 = vmatpush1.msra.mxu0 %v1271
        %1411 = vmatprep.subr.mxu0 0.0
        %1412 = vmatpush1.msra.mxu0 %v1272
        %1413 = vmatprep.subr.mxu0 0.0
        %1414 = vmatpush1.msra.mxu0 %v1273
        %1415 = vmatprep.subr.mxu0 0.0
        %1416 = vmatpush1.msra.mxu0 %v1274
        %1417 = vmatprep.subr.mxu0 0.0
        %1418 = vmatpush1.msra.mxu0 %v1275
        %1419 = vmatprep.subr.mxu0 0.0
        %1420 = vmatpush1.msra.mxu0 %v1276
        %1421 = vmatprep.subr.mxu0 0.0
        %1422 = vmatpush1.msra.mxu0 %v1277
        %1423 = vmatprep.subr.mxu0 0.0
        %1424 = vmatpush1.msra.mxu0 %v1278
        %1425 = vmatprep.subr.mxu0 0.0
        %1426 = vmatpush1.msra.mxu0 %v1279
        %1427 = vmatprep.subr.mxu0 0.0
        %1428 = vmatpush1.msra.mxu0 %v1280
        %1429 = vmatprep.subr.mxu0 0.0
        %1430 = vmatpush1.msra.mxu0 %v1281
        %1431 = vmatprep.subr.mxu0 0.0
        %1432 = vmatpush1.msra.mxu0 %v1282
        %1433 = vmatprep.subr.mxu0 0.0
        %1434 = vmatpush1.msra.mxu0 %v1283
        %1435 = vmatprep.subr.mxu0 0.0
        %1436 = vmatpush1.msra.mxu0 %v1284
        %1437 = vmatprep.subr.mxu0 0.0
        %1438 = vmatpush1.msra.mxu0 %v1285
        %1439 = vmatprep.subr.mxu0 0.0
        %1440 = vmatpush1.msra.mxu0 %v1286
        %1441 = vmatprep.subr.mxu0 0.0
        %1442 = vmatpush1.msra.mxu0 %v1287
        %1443 = vmatprep.subr.mxu0 0.0
        %1444 = vmatpush1.msra.mxu0 %v1288
        %1445 = vmatprep.subr.mxu0 0.0
        %1446 = vmatpush1.msra.mxu0 %v1289
        %1447 = vmatprep.subr.mxu0 0.0
        %1448 = vmatpush1.msra.mxu0 %v1290
        %1449 = vmatprep.subr.mxu0 0.0
        %1450 = vmatpush1.msra.mxu0 %v1291
        %1451 = vmatprep.subr.mxu0 0.0
        %1452 = vmatpush1.msra.mxu0 %v1292
        %1453 = vmatprep.mubr.f32.mxu0 %v1318
        %1454 = vmatmul.mubr.f32.gmra.mrb[0].mxu0 %v1317
        %v1455 = vpop.f32.mrb[0].mxu0
        %v1456 = vadd.f32 %v1386, %v1455
        %v1457 = vpop.f32.mrb[0].mxu0
        %1458 = vdwg.mxu0
        %v1459 = vpack.c.bf16 %v1456, %v1456
        %v1460 = vld [vmem:[%s3] sm:$0xf]
        %v1461 = vld [vmem:[%s3 + $0x4] sm:$0xf]
        %v1462 = vld [vmem:[%s3 + $0x8] sm:$0xf]
        %v1463 = vld [vmem:[%s3 + $0xc] sm:$0xf]
        %v1464 = vld [vmem:[%s3 + $0x10] sm:$0xf]
        %v1465 = vld [vmem:[%s3 + $0x14] sm:$0xf]
        %v1466 = vld [vmem:[%s3 + $0x18] sm:$0xf]
        %v1467 = vld [vmem:[%s3 + $0x1c] sm:$0xf]
        %v1468 = vld [vmem:[%s3 + $0x20] sm:$0xf]
        %v1469 = vld [vmem:[%s3 + $0x24] sm:$0xf]
        %v1470 = vld [vmem:[%s3 + $0x28] sm:$0xf]
        %v1471 = vld [vmem:[%s3 + $0x2c] sm:$0xf]
        %v1472 = vld [vmem:[%s3 + $0x30] sm:$0xf]
        %v1473 = vld [vmem:[%s3 + $0x34] sm:$0xf]
        %v1474 = vld [vmem:[%s3 + $0x38] sm:$0xf]
        %v1475 = vld [vmem:[%s3 + $0x3c] sm:$0xf]
        %v1476 = vld [vmem:[%s4] sm:$0x1]
        %v1478 = vlaneseq
        %v1479 = vshrl.u32 %v1478, 7
        %v1480 = vsub.s32 0, %v1479
        %v1481 = vrot.slane %v1476, %v1480
        %v1499 = vunpack.c.l.b16 %v1460
        %v1500 = vunpack.c.l.b16 %v1461
        %v1501 = vunpack.c.l.b16 %v1462
        %v1502 = vunpack.c.l.b16 %v1463
        %v1503 = vunpack.c.l.b16 %v1464
        %v1504 = vunpack.c.l.b16 %v1465
        %v1505 = vunpack.c.l.b16 %v1466
        %v1506 = vunpack.c.l.b16 %v1467
        %v1507 = vunpack.c.l.b16 %v1468
        %v1508 = vunpack.c.l.b16 %v1469
        %v1509 = vunpack.c.l.b16 %v1470
        %v1510 = vunpack.c.l.b16 %v1471
        %v1511 = vunpack.c.l.b16 %v1472
        %v1512 = vunpack.c.l.b16 %v1473
        %v1513 = vunpack.c.l.b16 %v1474
        %v1514 = vunpack.c.l.b16 %v1475
        %v1515 = vpack.c.b16 %v1500, %v1499
        %v1516 = vpack.c.b16 %v1502, %v1501
        %v1517 = vpack.c.b16 %v1504, %v1503
        %v1518 = vpack.c.b16 %v1506, %v1505
        %v1519 = vpack.c.b16 %v1508, %v1507
        %v1520 = vpack.c.b16 %v1510, %v1509
        %v1521 = vpack.c.b16 %v1512, %v1511
        %v1522 = vpack.c.b16 %v1514, %v1513
        %1531 = vmatprep.subr.bf16.mxu0 0
        %1532 = vmatpush1.bf16.msra.mxu0 %v1515
        %1533 = vmatprep.subr.bf16.mxu0 0
        %1534 = vmatpush1.bf16.msra.mxu0 %v1516
        %1535 = vmatprep.subr.bf16.mxu0 0
        %1536 = vmatpush1.bf16.msra.mxu0 %v1517
        %1537 = vmatprep.subr.bf16.mxu0 0
        %1538 = vmatpush1.bf16.msra.mxu0 %v1518
        %1539 = vmatprep.subr.bf16.mxu0 0
        %1540 = vmatpush1.bf16.msra.mxu0 %v1519
        %1541 = vmatprep.subr.bf16.mxu0 0
        %1542 = vmatpush1.bf16.msra.mxu0 %v1520
        %1543 = vmatprep.subr.bf16.mxu0 0
        %1544 = vmatpush1.bf16.msra.mxu0 %v1521
        %1545 = vmatprep.subr.bf16.mxu0 0
        %1546 = vmatpush1.bf16.msra.mxu0 %v1522
        %1547 = vmatprep.subr.bf16.mxu0 0
        %1548 = vmatpush1.bf16.msra.mxu0 0
        %1549 = vmatprep.subr.bf16.mxu0 0
        %1550 = vmatpush1.bf16.msra.mxu0 0
        %1551 = vmatprep.subr.bf16.mxu0 0
        %1552 = vmatpush1.bf16.msra.mxu0 0
        %1553 = vmatprep.subr.bf16.mxu0 0
        %1554 = vmatpush1.bf16.msra.mxu0 0
        %1555 = vmatprep.subr.bf16.mxu0 0
        %1556 = vmatpush1.bf16.msra.mxu0 0
        %1557 = vmatprep.subr.bf16.mxu0 0
        %1558 = vmatpush1.bf16.msra.mxu0 0
        %1559 = vmatprep.subr.bf16.mxu0 0
        %1560 = vmatpush1.bf16.msra.mxu0 0
        %1561 = vmatprep.subr.bf16.mxu0 0
        %1562 = vmatpush1.bf16.msra.mxu0 0
        %1563 = vmatprep.mubr.bf16.mxu0 0
        %1564 = vmatmul.mubr.bf16.gmra.mrb[0].mxu0 %v1459
        %v1565 = vpop.f32.mrb[0].mxu0
        %v1566 = vadd.f32 %v1481, %v1565
        %v1567 = vpop.f32.mrb[0].mxu0
        %v1568 = vpop.f32.mrb[0].mxu0
        %v1569 = vpop.f32.mrb[0].mxu0
        %1570 = vdwg.mxu0
        %v1571 = vpack.c.bf16 %v1566, %v1566
        %v1572 = vld [vmem:[%s5] sm:$0xff]
        %v1573 = vld [vmem:[%s5 + $0x8] sm:$0xff]
        %v1574 = vld [vmem:[%s5 + $0x10] sm:$0xff]
        %v1575 = vld [vmem:[%s5 + $0x18] sm:$0xff]
        %v1576 = vld [vmem:[%s5 + $0x20] sm:$0xff]
        %v1577 = vld [vmem:[%s5 + $0x28] sm:$0xff]
        %v1578 = vld [vmem:[%s5 + $0x30] sm:$0xff]
        %v1579 = vld [vmem:[%s5 + $0x38] sm:$0xff]
        %v1580 = vld [vmem:[%s5 + $0x40] sm:$0xff]
        %v1581 = vld [vmem:[%s5 + $0x48] sm:$0xff]
        %v1582 = vld [vmem:[%s5 + $0x50] sm:$0xff]
        %v1583 = vld [vmem:[%s5 + $0x58] sm:$0xff]
        %v1584 = vld [vmem:[%s5 + $0x60] sm:$0xff]
        %v1585 = vld [vmem:[%s5 + $0x68] sm:$0xff]
        %v1586 = vld [vmem:[%s5 + $0x70] sm:$0xff]
        %v1587 = vld [vmem:[%s5 + $0x78] sm:$0xff]
        %v1588 = vld [vmem:[%s6] sm:$0x3]
        %v1590 = vlaneseq
        %v1591 = vshrl.u32 %v1590, 7
        %v1592 = vsub.s32 0, %v1591
        %v1593 = vrot.slane %v1588, %v1592
        %v1594 = vlaneseq
        %v1595 = vshrl.u32 %v1594, 7
        %v1596 = vsub.s32 1, %v1595
        %v1597 = vrot.slane %v1588, %v1596
        %v1616 = vunpack.c.l.b16 %v1572
        %v1617 = vunpack.c.h.b16 %v1572
        %v1618 = vunpack.c.l.b16 %v1573
        %v1619 = vunpack.c.h.b16 %v1573
        %v1620 = vunpack.c.l.b16 %v1574
        %v1621 = vunpack.c.h.b16 %v1574
        %v1622 = vunpack.c.l.b16 %v1575
        %v1623 = vunpack.c.h.b16 %v1575
        %v1624 = vunpack.c.l.b16 %v1576
        %v1625 = vunpack.c.h.b16 %v1576
        %v1626 = vunpack.c.l.b16 %v1577
        %v1627 = vunpack.c.h.b16 %v1577
        %v1628 = vunpack.c.l.b16 %v1578
        %v1629 = vunpack.c.h.b16 %v1578
        %v1630 = vunpack.c.l.b16 %v1579
        %v1631 = vunpack.c.h.b16 %v1579
        %v1632 = vunpack.c.l.b16 %v1580
        %v1633 = vunpack.c.h.b16 %v1580
        %v1634 = vunpack.c.l.b16 %v1581
        %v1635 = vunpack.c.h.b16 %v1581
        %v1636 = vunpack.c.l.b16 %v1582
        %v1637 = vunpack.c.h.b16 %v1582
        %v1638 = vunpack.c.l.b16 %v1583
        %v1639 = vunpack.c.h.b16 %v1583
        %v1640 = vunpack.c.l.b16 %v1584
        %v1641 = vunpack.c.h.b16 %v1584
        %v1642 = vunpack.c.l.b16 %v1585
        %v1643 = vunpack.c.h.b16 %v1585
        %v1644 = vunpack.c.l.b16 %v1586
        %v1645 = vunpack.c.h.b16 %v1586
        %v1646 = vunpack.c.l.b16 %v1587
        %v1647 = vunpack.c.h.b16 %v1587
        %v1648 = vpack.c.b16 %v1618, %v1616
        %v1649 = vpack.c.b16 %v1619, %v1617
        %v1650 = vpack.c.b16 %v1622, %v1620
        %v1651 = vpack.c.b16 %v1623, %v1621
        %v1652 = vpack.c.b16 %v1626, %v1624
        %v1653 = vpack.c.b16 %v1627, %v1625
        %v1654 = vpack.c.b16 %v1630, %v1628
        %v1655 = vpack.c.b16 %v1631, %v1629
        %v1656 = vpack.c.b16 %v1634, %v1632
        %v1657 = vpack.c.b16 %v1635, %v1633
        %v1658 = vpack.c.b16 %v1638, %v1636
        %v1659 = vpack.c.b16 %v1639, %v1637
        %v1660 = vpack.c.b16 %v1642, %v1640
        %v1661 = vpack.c.b16 %v1643, %v1641
        %v1662 = vpack.c.b16 %v1646, %v1644
        %v1663 = vpack.c.b16 %v1647, %v1645
        %1680 = vmatprep.subr.bf16.mxu0 %v1649
        %1681 = vmatpush1.bf16.msra.mxu0 %v1648
        %1682 = vmatprep.subr.bf16.mxu0 %v1651
        %1683 = vmatpush1.bf16.msra.mxu0 %v1650
        %1684 = vmatprep.subr.bf16.mxu0 %v1653
        %1685 = vmatpush1.bf16.msra.mxu0 %v1652
        %1686 = vmatprep.subr.bf16.mxu0 %v1655
        %1687 = vmatpush1.bf16.msra.mxu0 %v1654
        %1688 = vmatprep.subr.bf16.mxu0 %v1657
        %1689 = vmatpush1.bf16.msra.mxu0 %v1656
        %1690 = vmatprep.subr.bf16.mxu0 %v1659
        %1691 = vmatpush1.bf16.msra.mxu0 %v1658
        %1692 = vmatprep.subr.bf16.mxu0 %v1661
        %1693 = vmatpush1.bf16.msra.mxu0 %v1660
        %1694 = vmatprep.subr.bf16.mxu0 %v1663
        %1695 = vmatpush1.bf16.msra.mxu0 %v1662
        %1696 = vmatprep.subr.bf16.mxu0 0
        %1697 = vmatpush1.bf16.msra.mxu0 0
        %1698 = vmatprep.subr.bf16.mxu0 0
        %1699 = vmatpush1.bf16.msra.mxu0 0
        %1700 = vmatprep.subr.bf16.mxu0 0
        %1701 = vmatpush1.bf16.msra.mxu0 0
        %1702 = vmatprep.subr.bf16.mxu0 0
        %1703 = vmatpush1.bf16.msra.mxu0 0
        %1704 = vmatprep.subr.bf16.mxu0 0
        %1705 = vmatpush1.bf16.msra.mxu0 0
        %1706 = vmatprep.subr.bf16.mxu0 0
        %1707 = vmatpush1.bf16.msra.mxu0 0
        %1708 = vmatprep.subr.bf16.mxu0 0
        %1709 = vmatpush1.bf16.msra.mxu0 0
        %1710 = vmatprep.subr.bf16.mxu0 0
        %1711 = vmatpush1.bf16.msra.mxu0 0
        %1712 = vmatprep.mubr.bf16.mxu0 0
        %1713 = vmatmul.mubr.bf16.gmra.mrb[0].mxu0 %v1571
        %v1714 = vpop.f32.mrb[0].mxu0
        %v1715 = vadd.f32 %v1593, %v1714
        %v1716 = vpop.f32.mrb[0].mxu0
        %v1717 = vadd.f32 %v1597, %v1716
        %v1718 = vpop.f32.mrb[0].mxu0
        %v1719 = vpop.f32.mrb[0].mxu0
        %1720 = vdwg.mxu0
        %v1721 = vsel %vm936, %v1715, 0.0
        %v1722 = vrot.slane %v1721, 4
        %v1723 = vadd.f32 %v1721, %v1722
        %v1724 = vrot.slane %v1723, 2
        %v1725 = vadd.f32 %v1723, %v1724
        %v1726 = vrot.slane %v1725, 1
        %v1727 = vadd.f32 %v1725, %v1726
        %v1728 = vsel %vm936, %v1717, 0.0
        %v1729 = vrot.slane %v1728, 4
        %v1730 = vadd.f32 %v1728, %v1729
        %v1731 = vrot.slane %v1730, 2
        %v1732 = vadd.f32 %v1730, %v1731
        %v1733 = vrot.slane %v1732, 1
        %v1734 = vadd.f32 %v1732, %v1733
        %v1735 = vmul.f32 %v1727, 0.5
        %v1736 = vmul.f32 %v1734, 0.5
        %v1737 = vsub.f32 %v1715, %v1735
        %v1738 = vsub.f32 %v1717, %v1736
        %v1739 = vmul.f32 %v1737, %v1737
        %v1740 = vmul.f32 %v1738, %v1738
        %v1741 = vsel %vm936, %v1739, 0.0
        %v1742 = vrot.slane %v1741, 4
        %v1743 = vadd.f32 %v1741, %v1742
        %v1744 = vrot.slane %v1743, 2
        %v1745 = vadd.f32 %v1743, %v1744
        %v1746 = vrot.slane %v1745, 1
        %v1747 = vadd.f32 %v1745, %v1746
        %v1748 = vsel %vm936, %v1740, 0.0
        %v1749 = vrot.slane %v1748, 4
        %v1750 = vadd.f32 %v1748, %v1749
        %v1751 = vrot.slane %v1750, 2
        %v1752 = vadd.f32 %v1750, %v1751
        %v1753 = vrot.slane %v1752, 1
        %v1754 = vadd.f32 %v1752, %v1753
        %v1755 = vmul.f32 %v1747, 0.5
        %v1756 = vmul.f32 %v1754, 0.5
        %v1757 = vadd.f32 %v1755, 1e-05
        %v1758 = vadd.f32 %v1756, 1e-05
        %v1759 = vrsqrt.pop %v1757
        %v1760 = vrsqrt.pop %v1758
        %v1761 = vmul.f32 %v1737, %v1759
        %v1762 = vmul.f32 %v1738, %v1760
        %v1763 = vld [vmem:[%s7] sm:$0x3]
        %v1765 = vlaneseq
        %v1766 = vshrl.u32 %v1765, 7
        %v1767 = vsub.s32 0, %v1766
        %v1768 = vrot.slane %v1763, %v1767
        %v1769 = vlaneseq
        %v1770 = vshrl.u32 %v1769, 7
        %v1771 = vsub.s32 1, %v1770
        %v1772 = vrot.slane %v1763, %v1771
        %v1775 = vmul.f32 %v1761, %v1768
        %v1776 = vmul.f32 %v1762, %v1772
        %v1777 = vld [vmem:[%s8] sm:$0x3]
        %v1779 = vlaneseq
        %v1780 = vshrl.u32 %v1779, 7
        %v1781 = vsub.s32 0, %v1780
        %v1782 = vrot.slane %v1777, %v1781
        %v1783 = vlaneseq
        %v1784 = vshrl.u32 %v1783, 7
        %v1785 = vsub.s32 1, %v1784
        %v1786 = vrot.slane %v1777, %v1785
        %v1789 = vadd.f32 %v1775, %v1782
        %v1790 = vadd.f32 %v1776, %v1786
        %v1791 = vmax.f32 %v1789, 0.0
        %v1792 = vmax.f32 %v1790, 0.0
        %v1793 = vpack.c.bf16 %v1791, %v1791
        %v1794 = vpack.c.bf16 %v1792, %v1792
        %v1795 = vld [vmem:[%s9] sm:$0xf]
        %v1796 = vld [vmem:[%s9 + $0x4] sm:$0xf]
        %v1797 = vld [vmem:[%s9 + $0x8] sm:$0xf]
        %v1798 = vld [vmem:[%s9 + $0xc] sm:$0xf]
        %v1799 = vld [vmem:[%s9 + $0x10] sm:$0xf]
        %v1800 = vld [vmem:[%s9 + $0x14] sm:$0xf]
        %v1801 = vld [vmem:[%s9 + $0x18] sm:$0xf]
        %v1802 = vld [vmem:[%s9 + $0x1c] sm:$0xf]
        %v1803 = vld [vmem:[%s9 + $0x20] sm:$0xf]
        %v1804 = vld [vmem:[%s9 + $0x24] sm:$0xf]
        %v1805 = vld [vmem:[%s9 + $0x28] sm:$0xf]
        %v1806 = vld [vmem:[%s9 + $0x2c] sm:$0xf]
        %v1807 = vld [vmem:[%s9 + $0x30] sm:$0xf]
        %v1808 = vld [vmem:[%s9 + $0x34] sm:$0xf]
        %v1809 = vld [vmem:[%s9 + $0x38] sm:$0xf]
        %v1810 = vld [vmem:[%s9 + $0x3c] sm:$0xf]
        %v1811 = vld [vmem:[%s9 + $0x40] sm:$0xf]
        %v1812 = vld [vmem:[%s9 + $0x44] sm:$0xf]
        %v1813 = vld [vmem:[%s9 + $0x48] sm:$0xf]
        %v1814 = vld [vmem:[%s9 + $0x4c] sm:$0xf]
        %v1815 = vld [vmem:[%s9 + $0x50] sm:$0xf]
        %v1816 = vld [vmem:[%s9 + $0x54] sm:$0xf]
        %v1817 = vld [vmem:[%s9 + $0x58] sm:$0xf]
        %v1818 = vld [vmem:[%s9 + $0x5c] sm:$0xf]
        %v1819 = vld [vmem:[%s9 + $0x60] sm:$0xf]
        %v1820 = vld [vmem:[%s9 + $0x64] sm:$0xf]
        %v1821 = vld [vmem:[%s9 + $0x68] sm:$0xf]
        %v1822 = vld [vmem:[%s9 + $0x6c] sm:$0xf]
        %v1823 = vld [vmem:[%s9 + $0x70] sm:$0xf]
        %v1824 = vld [vmem:[%s9 + $0x74] sm:$0xf]
        %v1825 = vld [vmem:[%s9 + $0x78] sm:$0xf]
        %v1826 = vld [vmem:[%s9 + $0x7c] sm:$0xf]
        %v1827 = vld [vmem:[%s10] sm:$0x1]
        %v1829 = vlaneseq
        %v1830 = vshrl.u32 %v1829, 7
        %v1831 = vsub.s32 0, %v1830
        %v1832 = vrot.slane %v1827, %v1831
        %v1866 = vunpack.c.l.b16 %v1795
        %v1867 = vunpack.c.l.b16 %v1796
        %v1868 = vunpack.c.l.b16 %v1797
        %v1869 = vunpack.c.l.b16 %v1798
        %v1870 = vunpack.c.l.b16 %v1799
        %v1871 = vunpack.c.l.b16 %v1800
        %v1872 = vunpack.c.l.b16 %v1801
        %v1873 = vunpack.c.l.b16 %v1802
        %v1874 = vunpack.c.l.b16 %v1803
        %v1875 = vunpack.c.l.b16 %v1804
        %v1876 = vunpack.c.l.b16 %v1805
        %v1877 = vunpack.c.l.b16 %v1806
        %v1878 = vunpack.c.l.b16 %v1807
        %v1879 = vunpack.c.l.b16 %v1808
        %v1880 = vunpack.c.l.b16 %v1809
        %v1881 = vunpack.c.l.b16 %v1810
        %v1882 = vunpack.c.l.b16 %v1811
        %v1883 = vunpack.c.l.b16 %v1812
        %v1884 = vunpack.c.l.b16 %v1813
        %v1885 = vunpack.c.l.b16 %v1814
        %v1886 = vunpack.c.l.b16 %v1815
        %v1887 = vunpack.c.l.b16 %v1816
        %v1888 = vunpack.c.l.b16 %v1817
        %v1889 = vunpack.c.l.b16 %v1818
        %v1890 = vunpack.c.l.b16 %v1819
        %v1891 = vunpack.c.l.b16 %v1820
        %v1892 = vunpack.c.l.b16 %v1821
        %v1893 = vunpack.c.l.b16 %v1822
        %v1894 = vunpack.c.l.b16 %v1823
        %v1895 = vunpack.c.l.b16 %v1824
        %v1896 = vunpack.c.l.b16 %v1825
        %v1897 = vunpack.c.l.b16 %v1826
        %v1898 = vpack.c.b16 %v1867, %v1866
        %v1899 = vpack.c.b16 %v1869, %v1868
        %v1900 = vpack.c.b16 %v1871, %v1870
        %v1901 = vpack.c.b16 %v1873, %v1872
        %v1902 = vpack.c.b16 %v1875, %v1874
        %v1903 = vpack.c.b16 %v1877, %v1876
        %v1904 = vpack.c.b16 %v1879, %v1878
        %v1905 = vpack.c.b16 %v1881, %v1880
        %v1906 = vpack.c.b16 %v1883, %v1882
        %v1907 = vpack.c.b16 %v1885, %v1884
        %v1908 = vpack.c.b16 %v1887, %v1886
        %v1909 = vpack.c.b16 %v1889, %v1888
        %v1910 = vpack.c.b16 %v1891, %v1890
        %v1911 = vpack.c.b16 %v1893, %v1892
        %v1912 = vpack.c.b16 %v1895, %v1894
        %v1913 = vpack.c.b16 %v1897, %v1896
        %1930 = vmatprep.subr.bf16.mxu0 0
        %1931 = vmatpush1.bf16.msra.mxu0 %v1898
        %1932 = vmatprep.subr.bf16.mxu0 0
        %1933 = vmatpush1.bf16.msra.mxu0 %v1899
        %1934 = vmatprep.subr.bf16.mxu0 0
        %1935 = vmatpush1.bf16.msra.mxu0 %v1900
        %1936 = vmatprep.subr.bf16.mxu0 0
        %1937 = vmatpush1.bf16.msra.mxu0 %v1901
        %1938 = vmatprep.subr.bf16.mxu0 0
        %1939 = vmatpush1.bf16.msra.mxu0 %v1902
        %1940 = vmatprep.subr.bf16.mxu0 0
        %1941 = vmatpush1.bf16.msra.mxu0 %v1903
        %1942 = vmatprep.subr.bf16.mxu0 0
        %1943 = vmatpush1.bf16.msra.mxu0 %v1904
        %1944 = vmatprep.subr.bf16.mxu0 0
        %1945 = vmatpush1.bf16.msra.mxu0 %v1905
        %1946 = vmatprep.subr.bf16.mxu0 0
        %1947 = vmatpush1.bf16.msra.mxu0 %v1906
        %1948 = vmatprep.subr.bf16.mxu0 0
        %1949 = vmatpush1.bf16.msra.mxu0 %v1907
        %1950 = vmatprep.subr.bf16.mxu0 0
        %1951 = vmatpush1.bf16.msra.mxu0 %v1908
        %1952 = vmatprep.subr.bf16.mxu0 0
        %1953 = vmatpush1.bf16.msra.mxu0 %v1909
        %1954 = vmatprep.subr.bf16.mxu0 0
        %1955 = vmatpush1.bf16.msra.mxu0 %v1910
        %1956 = vmatprep.subr.bf16.mxu0 0
        %1957 = vmatpush1.bf16.msra.mxu0 %v1911
        %1958 = vmatprep.subr.bf16.mxu0 0
        %1959 = vmatpush1.bf16.msra.mxu0 %v1912
        %1960 = vmatprep.subr.bf16.mxu0 0
        %1961 = vmatpush1.bf16.msra.mxu0 %v1913
        %1962 = vmatprep.mubr.bf16.mxu0 %v1794
        %1963 = vmatmul.mubr.bf16.gmra.mrb[0].mxu0 %v1793
        %v1964 = vpop.f32.mrb[0].mxu0
        %v1965 = vadd.f32 %v1832, %v1964
        %v1966 = vpop.f32.mrb[0].mxu0
        %v1967 = vpop.f32.mrb[0].mxu0
        %v1968 = vpop.f32.mrb[0].mxu0
        %1969 = vdwg.mxu0
        %1970 = vst [vmem:[%s573] sm:$0x3] %v1965
        %v1971 = vld [vmem:[%s11] sm:$0xff]
        %v1972 = vld [vmem:[%s11 + $0x8] sm:$0xff]
        %v1973 = vld [vmem:[%s11 + $0x10] sm:$0xff]
        %v1974 = vld [vmem:[%s11 + $0x18] sm:$0xff]
        %v1975 = vld [vmem:[%s11 + $0x20] sm:$0xff]
        %v1976 = vld [vmem:[%s11 + $0x28] sm:$0xff]
        %v1977 = vld [vmem:[%s11 + $0x30] sm:$0xff]
        %v1978 = vld [vmem:[%s11 + $0x38] sm:$0xff]
        %v1979 = vld [vmem:[%s11 + $0x40] sm:$0xff]
        %v1980 = vld [vmem:[%s11 + $0x48] sm:$0xff]
        %v1981 = vld [vmem:[%s11 + $0x50] sm:$0xff]
        %v1982 = vld [vmem:[%s11 + $0x58] sm:$0xff]
        %v1983 = vld [vmem:[%s11 + $0x60] sm:$0xff]
        %v1984 = vld [vmem:[%s11 + $0x68] sm:$0xff]
        %v1985 = vld [vmem:[%s11 + $0x70] sm:$0xff]
        %v1986 = vld [vmem:[%s11 + $0x78] sm:$0xff]
        %v1987 = vld [vmem:[%s12] sm:$0x3]
        %v1989 = vlaneseq
        %v1990 = vshrl.u32 %v1989, 7
        %v1991 = vsub.s32 0, %v1990
        %v1992 = vrot.slane %v1987, %v1991
        %v1993 = vlaneseq
        %v1994 = vshrl.u32 %v1993, 7
        %v1995 = vsub.s32 1, %v1994
        %v1996 = vrot.slane %v1987, %v1995
        %v2015 = vunpack.c.l.b16 %v1971
        %v2016 = vunpack.c.h.b16 %v1971
        %v2017 = vunpack.c.l.b16 %v1972
        %v2018 = vunpack.c.h.b16 %v1972
        %v2019 = vunpack.c.l.b16 %v1973
        %v2020 = vunpack.c.h.b16 %v1973
        %v2021 = vunpack.c.l.b16 %v1974
        %v2022 = vunpack.c.h.b16 %v1974
        %v2023 = vunpack.c.l.b16 %v1975
        %v2024 = vunpack.c.h.b16 %v1975
        %v2025 = vunpack.c.l.b16 %v1976
        %v2026 = vunpack.c.h.b16 %v1976
        %v2027 = vunpack.c.l.b16 %v1977
        %v2028 = vunpack.c.h.b16 %v1977
        %v2029 = vunpack.c.l.b16 %v1978
        %v2030 = vunpack.c.h.b16 %v1978
        %v2031 = vunpack.c.l.b16 %v1979
        %v2032 = vunpack.c.h.b16 %v1979
        %v2033 = vunpack.c.l.b16 %v1980
        %v2034 = vunpack.c.h.b16 %v1980
        %v2035 = vunpack.c.l.b16 %v1981
        %v2036 = vunpack.c.h.b16 %v1981
        %v2037 = vunpack.c.l.b16 %v1982
        %v2038 = vunpack.c.h.b16 %v1982
        %v2039 = vunpack.c.l.b16 %v1983
        %v2040 = vunpack.c.h.b16 %v1983
        %v2041 = vunpack.c.l.b16 %v1984
        %v2042 = vunpack.c.h.b16 %v1984
        %v2043 = vunpack.c.l.b16 %v1985
        %v2044 = vunpack.c.h.b16 %v1985
        %v2045 = vunpack.c.l.b16 %v1986
        %v2046 = vunpack.c.h.b16 %v1986
        %v2047 = vpack.c.b16 %v2017, %v2015
        %v2048 = vpack.c.b16 %v2018, %v2016
        %v2049 = vpack.c.b16 %v2021, %v2019
        %v2050 = vpack.c.b16 %v2022, %v2020
        %v2051 = vpack.c.b16 %v2025, %v2023
        %v2052 = vpack.c.b16 %v2026, %v2024
        %v2053 = vpack.c.b16 %v2029, %v2027
        %v2054 = vpack.c.b16 %v2030, %v2028
        %v2055 = vpack.c.b16 %v2033, %v2031
        %v2056 = vpack.c.b16 %v2034, %v2032
        %v2057 = vpack.c.b16 %v2037, %v2035
        %v2058 = vpack.c.b16 %v2038, %v2036
        %v2059 = vpack.c.b16 %v2041, %v2039
        %v2060 = vpack.c.b16 %v2042, %v2040
        %v2061 = vpack.c.b16 %v2045, %v2043
        %v2062 = vpack.c.b16 %v2046, %v2044
        %2079 = vmatprep.subr.bf16.mxu0 %v2048
        %2080 = vmatpush1.bf16.msra.mxu0 %v2047
        %2081 = vmatprep.subr.bf16.mxu0 %v2050
        %2082 = vmatpush1.bf16.msra.mxu0 %v2049
        %2083 = vmatprep.subr.bf16.mxu0 %v2052
        %2084 = vmatpush1.bf16.msra.mxu0 %v2051
        %2085 = vmatprep.subr.bf16.mxu0 %v2054
        %2086 = vmatpush1.bf16.msra.mxu0 %v2053
        %2087 = vmatprep.subr.bf16.mxu0 %v2056
        %2088 = vmatpush1.bf16.msra.mxu0 %v2055
        %2089 = vmatprep.subr.bf16.mxu0 %v2058
        %2090 = vmatpush1.bf16.msra.mxu0 %v2057
        %2091 = vmatprep.subr.bf16.mxu0 %v2060
        %2092 = vmatpush1.bf16.msra.mxu0 %v2059
        %2093 = vmatprep.subr.bf16.mxu0 %v2062
        %2094 = vmatpush1.bf16.msra.mxu0 %v2061
        %2095 = vmatprep.subr.bf16.mxu0 0
        %2096 = vmatpush1.bf16.msra.mxu0 0
        %2097 = vmatprep.subr.bf16.mxu0 0
        %2098 = vmatpush1.bf16.msra.mxu0 0
        %2099 = vmatprep.subr.bf16.mxu0 0
        %2100 = vmatpush1.bf16.msra.mxu0 0
        %2101 = vmatprep.subr.bf16.mxu0 0
        %2102 = vmatpush1.bf16.msra.mxu0 0
        %2103 = vmatprep.subr.bf16.mxu0 0
        %2104 = vmatpush1.bf16.msra.mxu0 0
        %2105 = vmatprep.subr.bf16.mxu0 0
        %2106 = vmatpush1.bf16.msra.mxu0 0
        %2107 = vmatprep.subr.bf16.mxu0 0
        %2108 = vmatpush1.bf16.msra.mxu0 0
        %2109 = vmatprep.subr.bf16.mxu0 0
        %2110 = vmatpush1.bf16.msra.mxu0 0
        %2111 = vmatprep.mubr.bf16.mxu0 0
        %2112 = vmatmul.mubr.bf16.gmra.mrb[0].mxu0 %v1571
        %v2113 = vpop.f32.mrb[0].mxu0
        %v2114 = vadd.f32 %v1992, %v2113
        %v2115 = vpop.f32.mrb[0].mxu0
        %v2116 = vadd.f32 %v1996, %v2115
        %v2117 = vpop.f32.mrb[0].mxu0
        %v2118 = vpop.f32.mrb[0].mxu0
        %2119 = vdwg.mxu0
        %v2120 = vsel %vm936, %v2114, 0.0
        %v2121 = vrot.slane %v2120, 4
        %v2122 = vadd.f32 %v2120, %v2121
        %v2123 = vrot.slane %v2122, 2
        %v2124 = vadd.f32 %v2122, %v2123
        %v2125 = vrot.slane %v2124, 1
        %v2126 = vadd.f32 %v2124, %v2125
        %v2127 = vsel %vm936, %v2116, 0.0
        %v2128 = vrot.slane %v2127, 4
        %v2129 = vadd.f32 %v2127, %v2128
        %v2130 = vrot.slane %v2129, 2
        %v2131 = vadd.f32 %v2129, %v2130
        %v2132 = vrot.slane %v2131, 1
        %v2133 = vadd.f32 %v2131, %v2132
        %v2134 = vmul.f32 %v2126, 0.5
        %v2135 = vmul.f32 %v2133, 0.5
        %v2136 = vsub.f32 %v2114, %v2134
        %v2137 = vsub.f32 %v2116, %v2135
        %v2138 = vmul.f32 %v2136, %v2136
        %v2139 = vmul.f32 %v2137, %v2137
        %v2140 = vsel %vm936, %v2138, 0.0
        %v2141 = vrot.slane %v2140, 4
        %v2142 = vadd.f32 %v2140, %v2141
        %v2143 = vrot.slane %v2142, 2
        %v2144 = vadd.f32 %v2142, %v2143
        %v2145 = vrot.slane %v2144, 1
        %v2146 = vadd.f32 %v2144, %v2145
        %v2147 = vsel %vm936, %v2139, 0.0
        %v2148 = vrot.slane %v2147, 4
        %v2149 = vadd.f32 %v2147, %v2148
        %v2150 = vrot.slane %v2149, 2
        %v2151 = vadd.f32 %v2149, %v2150
        %v2152 = vrot.slane %v2151, 1
        %v2153 = vadd.f32 %v2151, %v2152
        %v2154 = vmul.f32 %v2146, 0.5
        %v2155 = vmul.f32 %v2153, 0.5
        %v2156 = vadd.f32 %v2154, 1e-05
        %v2157 = vadd.f32 %v2155, 1e-05
        %v2158 = vrsqrt.pop %v2156
        %v2159 = vrsqrt.pop %v2157
        %v2160 = vmul.f32 %v2136, %v2158
        %v2161 = vmul.f32 %v2137, %v2159
        %v2162 = vld [vmem:[%s13] sm:$0x3]
        %v2164 = vlaneseq
        %v2165 = vshrl.u32 %v2164, 7
        %v2166 = vsub.s32 0, %v2165
        %v2167 = vrot.slane %v2162, %v2166
        %v2168 = vlaneseq
        %v2169 = vshrl.u32 %v2168, 7
        %v2170 = vsub.s32 1, %v2169
        %v2171 = vrot.slane %v2162, %v2170
        %v2174 = vmul.f32 %v2160, %v2167
        %v2175 = vmul.f32 %v2161, %v2171
        %v2176 = vld [vmem:[%s14] sm:$0x3]
        %v2178 = vlaneseq
        %v2179 = vshrl.u32 %v2178, 7
        %v2180 = vsub.s32 0, %v2179
        %v2181 = vrot.slane %v2176, %v2180
        %v2182 = vlaneseq
        %v2183 = vshrl.u32 %v2182, 7
        %v2184 = vsub.s32 1, %v2183
        %v2185 = vrot.slane %v2176, %v2184
        %v2188 = vadd.f32 %v2174, %v2181
        %v2189 = vadd.f32 %v2175, %v2185
        %v2190 = vmax.f32 %v2188, 0.0
        %v2191 = vmax.f32 %v2189, 0.0
        %v2192 = vpack.c.bf16 %v2190, %v2190
        %v2193 = vpack.c.bf16 %v2191, %v2191
        %v2194 = vld [vmem:[%s15] sm:$0xf]
        %v2195 = vld [vmem:[%s15 + $0x4] sm:$0xf]
        %v2196 = vld [vmem:[%s15 + $0x8] sm:$0xf]
        %v2197 = vld [vmem:[%s15 + $0xc] sm:$0xf]
        %v2198 = vld [vmem:[%s15 + $0x10] sm:$0xf]
        %v2199 = vld [vmem:[%s15 + $0x14] sm:$0xf]
        %v2200 = vld [vmem:[%s15 + $0x18] sm:$0xf]
        %v2201 = vld [vmem:[%s15 + $0x1c] sm:$0xf]
        %v2202 = vld [vmem:[%s15 + $0x20] sm:$0xf]
        %v2203 = vld [vmem:[%s15 + $0x24] sm:$0xf]
        %v2204 = vld [vmem:[%s15 + $0x28] sm:$0xf]
        %v2205 = vld [vmem:[%s15 + $0x2c] sm:$0xf]
        %v2206 = vld [vmem:[%s15 + $0x30] sm:$0xf]
        %v2207 = vld [vmem:[%s15 + $0x34] sm:$0xf]
        %v2208 = vld [vmem:[%s15 + $0x38] sm:$0xf]
        %v2209 = vld [vmem:[%s15 + $0x3c] sm:$0xf]
        %v2210 = vld [vmem:[%s15 + $0x40] sm:$0xf]
        %v2211 = vld [vmem:[%s15 + $0x44] sm:$0xf]
        %v2212 = vld [vmem:[%s15 + $0x48] sm:$0xf]
        %v2213 = vld [vmem:[%s15 + $0x4c] sm:$0xf]
        %v2214 = vld [vmem:[%s15 + $0x50] sm:$0xf]
        %v2215 = vld [vmem:[%s15 + $0x54] sm:$0xf]
        %v2216 = vld [vmem:[%s15 + $0x58] sm:$0xf]
        %v2217 = vld [vmem:[%s15 + $0x5c] sm:$0xf]
        %v2218 = vld [vmem:[%s15 + $0x60] sm:$0xf]
        %v2219 = vld [vmem:[%s15 + $0x64] sm:$0xf]
        %v2220 = vld [vmem:[%s15 + $0x68] sm:$0xf]
        %v2221 = vld [vmem:[%s15 + $0x6c] sm:$0xf]
        %v2222 = vld [vmem:[%s15 + $0x70] sm:$0xf]
        %v2223 = vld [vmem:[%s15 + $0x74] sm:$0xf]
        %v2224 = vld [vmem:[%s15 + $0x78] sm:$0xf]
        %v2225 = vld [vmem:[%s15 + $0x7c] sm:$0xf]
        %v2226 = vld [vmem:[%s16] sm:$0x1]
        %v2228 = vlaneseq
        %v2229 = vshrl.u32 %v2228, 7
        %v2230 = vsub.s32 0, %v2229
        %v2231 = vrot.slane %v2226, %v2230
        %v2265 = vunpack.c.l.b16 %v2194
        %v2266 = vunpack.c.l.b16 %v2195
        %v2267 = vunpack.c.l.b16 %v2196
        %v2268 = vunpack.c.l.b16 %v2197
        %v2269 = vunpack.c.l.b16 %v2198
        %v2270 = vunpack.c.l.b16 %v2199
        %v2271 = vunpack.c.l.b16 %v2200
        %v2272 = vunpack.c.l.b16 %v2201
        %v2273 = vunpack.c.l.b16 %v2202
        %v2274 = vunpack.c.l.b16 %v2203
        %v2275 = vunpack.c.l.b16 %v2204
        %v2276 = vunpack.c.l.b16 %v2205
        %v2277 = vunpack.c.l.b16 %v2206
        %v2278 = vunpack.c.l.b16 %v2207
        %v2279 = vunpack.c.l.b16 %v2208
        %v2280 = vunpack.c.l.b16 %v2209
        %v2281 = vunpack.c.l.b16 %v2210
        %v2282 = vunpack.c.l.b16 %v2211
        %v2283 = vunpack.c.l.b16 %v2212
        %v2284 = vunpack.c.l.b16 %v2213
        %v2285 = vunpack.c.l.b16 %v2214
        %v2286 = vunpack.c.l.b16 %v2215
        %v2287 = vunpack.c.l.b16 %v2216
        %v2288 = vunpack.c.l.b16 %v2217
        %v2289 = vunpack.c.l.b16 %v2218
        %v2290 = vunpack.c.l.b16 %v2219
        %v2291 = vunpack.c.l.b16 %v2220
        %v2292 = vunpack.c.l.b16 %v2221
        %v2293 = vunpack.c.l.b16 %v2222
        %v2294 = vunpack.c.l.b16 %v2223
        %v2295 = vunpack.c.l.b16 %v2224
        %v2296 = vunpack.c.l.b16 %v2225
        %v2297 = vpack.c.b16 %v2266, %v2265
        %v2298 = vpack.c.b16 %v2268, %v2267
        %v2299 = vpack.c.b16 %v2270, %v2269
        %v2300 = vpack.c.b16 %v2272, %v2271
        %v2301 = vpack.c.b16 %v2274, %v2273
        %v2302 = vpack.c.b16 %v2276, %v2275
        %v2303 = vpack.c.b16 %v2278, %v2277
        %v2304 = vpack.c.b16 %v2280, %v2279
        %v2305 = vpack.c.b16 %v2282, %v2281
        %v2306 = vpack.c.b16 %v2284, %v2283
        %v2307 = vpack.c.b16 %v2286, %v2285
        %v2308 = vpack.c.b16 %v2288, %v2287
        %v2309 = vpack.c.b16 %v2290, %v2289
        %v2310 = vpack.c.b16 %v2292, %v2291
        %v2311 = vpack.c.b16 %v2294, %v2293
        %v2312 = vpack.c.b16 %v2296, %v2295
        %2329 = vmatprep.subr.bf16.mxu0 0
        %2330 = vmatpush1.bf16.msra.mxu0 %v2297
        %2331 = vmatprep.subr.bf16.mxu0 0
        %2332 = vmatpush1.bf16.msra.mxu0 %v2298
        %2333 = vmatprep.subr.bf16.mxu0 0
        %2334 = vmatpush1.bf16.msra.mxu0 %v2299
        %2335 = vmatprep.subr.bf16.mxu0 0
        %2336 = vmatpush1.bf16.msra.mxu0 %v2300
        %2337 = vmatprep.subr.bf16.mxu0 0
        %2338 = vmatpush1.bf16.msra.mxu0 %v2301
        %2339 = vmatprep.subr.bf16.mxu0 0
        %2340 = vmatpush1.bf16.msra.mxu0 %v2302
        %2341 = vmatprep.subr.bf16.mxu0 0
        %2342 = vmatpush1.bf16.msra.mxu0 %v2303
        %2343 = vmatprep.subr.bf16.mxu0 0
        %2344 = vmatpush1.bf16.msra.mxu0 %v2304
        %2345 = vmatprep.subr.bf16.mxu0 0
        %2346 = vmatpush1.bf16.msra.mxu0 %v2305
        %2347 = vmatprep.subr.bf16.mxu0 0
        %2348 = vmatpush1.bf16.msra.mxu0 %v2306
        %2349 = vmatprep.subr.bf16.mxu0 0
        %2350 = vmatpush1.bf16.msra.mxu0 %v2307
        %2351 = vmatprep.subr.bf16.mxu0 0
        %2352 = vmatpush1.bf16.msra.mxu0 %v2308
        %2353 = vmatprep.subr.bf16.mxu0 0
        %2354 = vmatpush1.bf16.msra.mxu0 %v2309
        %2355 = vmatprep.subr.bf16.mxu0 0
        %2356 = vmatpush1.bf16.msra.mxu0 %v2310
        %2357 = vmatprep.subr.bf16.mxu0 0
        %2358 = vmatpush1.bf16.msra.mxu0 %v2311
        %2359 = vmatprep.subr.bf16.mxu0 0
        %2360 = vmatpush1.bf16.msra.mxu0 %v2312
        %2361 = vmatprep.mubr.bf16.mxu0 %v2193
        %2362 = vmatmul.mubr.bf16.gmra.mrb[0].mxu0 %v2192
        %v2363 = vpop.f32.mrb[0].mxu0
        %v2364 = vadd.f32 %v2231, %v2363
        %v2365 = vpop.f32.mrb[0].mxu0
        %v2366 = vpop.f32.mrb[0].mxu0
        %v2367 = vpop.f32.mrb[0].mxu0
        %2368 = vdwg.mxu0
        %2369 = vst [vmem:[%s580] sm:$0x3] %v2364
        %s2370 = sand.u32 %s406, 1
        %s2371 = scalar_lea.sflag [#allocation3], %s2370
        %s2372 = sand.u32 %s406, 1
        %s2373 = smul.addr %s2372, 2
        %s2374 = scalar_lea.vmem [#allocation2], %s2373
        %s2375 = sand.u32 %s432, 1
        %s2376 = scalar_lea.sflag [#allocation5], %s2375
        %s2377 = sand.u32 %s432, 1
        %s2378 = smul.addr %s2377, 2
        %s2379 = scalar_lea.vmem [#allocation4], %s2378
        // Predicated region
        $region89: #{tpu_custom_call.1} parent=87 // pred_check
          %p2380 = pneg %p416
        $region90: #{tpu_custom_call.1} parent=87 // pred_check_branch
          %2382 = sbr.rel (%p2380) target = $region92
        $region91: #{tpu_custom_call.1} parent=87 // pred_region
          %s2384 = ssub.s32 32, 32
          %2385 = vsyncadd %s2371, %s2384
          %s2386 = smul.addr %s36, 32
          %s2387 = scalar_lea.hbm %s17, %s2386
          %s2389 = sshll.u32 %s2374, 4
          %s2390 = int_to_ptr.vmem [resolvable:$true] %s2389
          %2392 = dma.vmem_to_hbm [thread:$0]  %s2390, 32, %s2387, %s2371
        $region92: #{tpu_custom_call.1} parent=87 // pred_fallthru
          _
        // Predicated region
        $region93: #{tpu_custom_call.1} parent=87 // pred_check
          %p2393 = pneg %p442
        $region94: #{tpu_custom_call.1} parent=87 // pred_check_branch
          %2395 = sbr.rel (%p2393) target = $region96
        $region95: #{tpu_custom_call.1} parent=87 // pred_region
          %s2397 = ssub.s32 32, 32
          %2398 = vsyncadd %s2376, %s2397
          %s2399 = smul.addr %s36, 32
          %s2400 = scalar_lea.hbm %s18, %s2399
          %s2402 = sshll.u32 %s2379, 4
          %s2403 = int_to_ptr.vmem [resolvable:$true] %s2402
          %2405 = dma.vmem_to_hbm [thread:$0]  %s2403, 32, %s2400, %s2376
        $region96: #{tpu_custom_call.1} parent=87 // pred_fallthru
          _
      $region88: #{tpu_custom_call.1} parent=5 // pred_fallthru
        _
      %p2406 = scmp.le.s32.totalorder 2, %s31
      // Predicated region
      $region97: #{tpu_custom_call.1} parent=5 // pred_check
        %p2407 = pneg %p2406
      $region98: #{tpu_custom_call.1} parent=5 // pred_check_branch
        %2409 = sbr.rel (%p2407) target = $region100
      $region99: #{tpu_custom_call.1} parent=5 // pred_region
        %s2410 = ssub.s32 %s31, 2
        // Predicated region
        $region101: #{tpu_custom_call.1} parent=99 // pred_check
          %p2411 = pneg %p422
        $region102: #{tpu_custom_call.1} parent=99 // pred_check_branch
          %2413 = sbr.rel (%p2411) target = $region104
        $region103: #{tpu_custom_call.1} parent=99 // pred_region
          %s2414 = sand.u32 %s407, 1
          %s2415 = scalar_lea.sflag [#allocation3], %s2414
          %s2416 = sand.u32 %s407, 1
          %s2417 = smul.addr %s2416, 2
          %s2418 = scalar_lea.vmem [#allocation2], %s2417
          %2419 = dma.done %s2415, 32
        $region104: #{tpu_custom_call.1} parent=99 // pred_fallthru
          _
        // Predicated region
        $region105: #{tpu_custom_call.1} parent=99 // pred_check
          %p2420 = pneg %p448
        $region106: #{tpu_custom_call.1} parent=99 // pred_check_branch
          %2422 = sbr.rel (%p2420) target = $region108
        $region107: #{tpu_custom_call.1} parent=99 // pred_region
          %s2423 = sand.u32 %s433, 1
          %s2424 = scalar_lea.sflag [#allocation5], %s2423
          %s2425 = sand.u32 %s433, 1
          %s2426 = smul.addr %s2425, 2
          %s2427 = scalar_lea.vmem [#allocation4], %s2426
          %2428 = dma.done %s2424, 32
        $region108: #{tpu_custom_call.1} parent=99 // pred_fallthru
          _
      $region100: #{tpu_custom_call.1} parent=5 // pred_fallthru
        _
    $region6: #{tpu_custom_call.1} parent=1 // loop_footer
      %s35 = sadd.s32 1, %s31
    $region7: #{tpu_custom_call.1} parent=1 // loop_footer_branch
      %30 = sbr.rel target = $region3
    $region8: #{tpu_custom_call.1} parent=1 // loop_exit
      _
    %2429 = vsyncpa [#allocation3], 1
    %s2430 = scalar_lea.sflag [#allocation3], 1
    %2431 = vsyncpa %s2430, 1
    %2432 = vsyncpa [#allocation5], 1
    %s2433 = scalar_lea.sflag [#allocation5], 1
    %2434 = vsyncpa %s2433, 1

</llo_original>
